<compile_context>
chip_gen: v7x
topology: tpu7x:2x2x1
jax: 0.10.0
libtpu: 0.0.40
codegen_flags: <defaults>
</compile_context>

<pallas_src>
import functools

import jax
import jax.numpy as jnp
from jax import lax
from jax.experimental import pallas as pl
from jax.experimental.pallas import tpu as pltpu

LEAKY_SLOPE = 0.01  # F.leaky_relu default negative_slope


# ----------------------------------------------------------------------------
# Single fused kernel: one batch element per grid step.
#   inputs : A (1,N,N), X (1,N,Cin), 5x (W, b) resident weight pairs
#   outputs: recon_edge (1,N,N), x_recon (1,N,Cin), z (1,N,2*conv_ch)
# ----------------------------------------------------------------------------
def _fused_autoencoder_kernel(a_ref, x_ref,
                              w1_ref, b1_ref, w2_ref, b2_ref,
                              we_ref, be_ref, wd2_ref, bd2_ref,
                              wd3_ref, bd3_ref,
                              edge_ref, xrec_ref, z_ref,
                              *, compute_dtype):
    a = a_ref[0].astype(compute_dtype)          # (N, N) -- loaded once, reused 5x

    def gconv_lrelu(h, w_ref, b_ref):
        # leaky_relu( A @ (h @ W) + b ), accumulation in f32 on the MXU.
        xw = jnp.dot(h.astype(compute_dtype), w_ref[...].astype(compute_dtype),
                     preferred_element_type=jnp.float32)
        out = jnp.dot(a, xw.astype(compute_dtype),
                      preferred_element_type=jnp.float32) + b_ref[...]
        return jnp.where(out >= 0, out, LEAKY_SLOPE * out)

    x = x_ref[0]                                # (N, Cin)
    x1 = gconv_lrelu(x, w1_ref, b1_ref)         # (N, conv_ch)
    z = gconv_lrelu(x1, w2_ref, b2_ref)         # (N, 2*conv_ch)

    # edge decoder + reconstruction: sigmoid(R @ R^T), contraction over channels
    re = gconv_lrelu(z, we_ref, be_ref)         # (N, conv_ch)
    re_c = re.astype(compute_dtype)
    s = lax.dot_general(re_c, re_c, (((1,), (1,)), ((), ())),
                        preferred_element_type=jnp.float32)     # (N, N)
    edge_ref[0] = jax.nn.sigmoid(s)

    # node-feature decoder
    xd = gconv_lrelu(z, wd2_ref, bd2_ref)       # (N, conv_ch)
    xrec_ref[0] = gconv_lrelu(xd, wd3_ref, bd3_ref)             # (N, Cin)
    z_ref[0] = z


def _forward(x, adj, params, compute_dtype=jnp.float32):
    """x: (B,N,Cin)  adj: (B,N,N)  -> (recon_edge (B,N,N), x_recon (B,N,Cin), z)."""
    B, N, Cin = x.shape
    conv_ch = params["conv1"][0].shape[1]

    layer_order = ("conv1", "conv2", "edge_decoder_conv",
                   "x_decoder_conv2", "x_decoder_conv3")

    weight_inputs = []
    weight_specs = []
    for name in layer_order:
        w, b = params[name]
        cin, cout = w.shape
        weight_inputs += [w, b.reshape(1, cout)]
        # Resident weights: full-array blocks, constant block index (no re-DMA
        # across grid steps).
        weight_specs += [
            pl.BlockSpec((cin, cout), lambda i: (0, 0)),
            pl.BlockSpec((1, cout), lambda i: (0, 0)),
        ]

    # TODO(synk): for large N, row-tile A/outputs over a second ("parallel")
    # grid axis and set pltpu.CompilerParams(vmem_limit_bytes=...) explicitly;
    # at N=16 the whole problem fits trivially in VMEM on every generation.
    kernel = functools.partial(_fused_autoencoder_kernel,
                               compute_dtype=compute_dtype)

    recon_edge, x_recon, z = pl.pallas_call(
        kernel,
        out_shape=(
            jax.ShapeDtypeStruct((B, N, N), jnp.float32),
            jax.ShapeDtypeStruct((B, N, Cin), jnp.float32),
            jax.ShapeDtypeStruct((B, N, 2 * conv_ch), jnp.float32),
        ),
        grid=(B,),
        in_specs=[
            pl.BlockSpec((1, N, N), lambda i: (i, 0, 0)),      # A   -- DMA'd once/batch
            pl.BlockSpec((1, N, Cin), lambda i: (i, 0, 0)),    # X
            *weight_specs,
        ],
        out_specs=(
            pl.BlockSpec((1, N, N), lambda i: (i, 0, 0)),
            pl.BlockSpec((1, N, Cin), lambda i: (i, 0, 0)),
            pl.BlockSpec((1, N, 2 * conv_ch), lambda i: (i, 0, 0)),
        ),
        compiler_params=pltpu.CompilerParams(
            dimension_semantics=("parallel",)),
    )(adj, x, *weight_inputs)
    return recon_edge, x_recon, z


autoencoderat_forward = jax.jit(_forward, static_argnames=("compute_dtype",))


# ----------------------------------------------------------------------------
# Parameter construction (deterministic, glorot-uniform-ish, zero bias)
# ----------------------------------------------------------------------------
def init_params(key, in_channels, conv_ch):
    shapes = {
        "conv1": (in_channels, conv_ch),
        "conv2": (conv_ch, conv_ch * 2),
        "edge_decoder_conv": (conv_ch * 2, conv_ch),
        "x_decoder_conv2": (conv_ch * 2, conv_ch),
        "x_decoder_conv3": (conv_ch, in_channels),
    }
    params = {}
    for i, (name, (cin, cout)) in enumerate(shapes.items()):
        k = jax.random.fold_in(key, i)
        limit = (6.0 / (cin + cout)) ** 0.5
        w = jax.random.uniform(k, (cin, cout), jnp.float32, -limit, limit)
        b = jnp.zeros((cout,), jnp.float32)
        params[name] = (w, b)
    return params


if __name__ == "__main__":
    key = jax.random.PRNGKey(0)

    B, N = 2, 16          # batch, number of graph nodes
    in_channels, conv_ch = 4, 8

    kx, ka, kp = jax.random.split(key, 3)
    x = jax.random.normal(kx, (B, N, in_channels), jnp.float32)
    # dense symmetric binary adjacency with self-loops
    a = (jax.random.uniform(ka, (B, N, N)) > 0.7).astype(jnp.float32)
    adj = jnp.clip(a + jnp.swapaxes(a, 1, 2) + jnp.eye(N)[None], 0.0, 1.0)

    params = init_params(kp, in_channels, conv_ch)

    recon_edge, x_recon, z = autoencoderat_forward(x, adj, params)
    jax.block_until_ready((recon_edge, x_recon, z))

    assert recon_edge.shape == (B, N, N)
    assert x_recon.shape == (B, N, in_channels)
    assert z.shape == (B, N, conv_ch * 2)

    # sanity check against a pure-JAX reference (f32 compute path)
    def ref_gconv(a_, x_, w_, b_):
        h = jnp.einsum("bij,bjk->bik", a_, x_ @ w_) + b_
        return jnp.where(h >= 0, h, LEAKY_SLOPE * h)

    rx1 = ref_gconv(adj, x, *params["conv1"])
    rz = ref_gconv(adj, rx1, *params["conv2"])
    rre = ref_gconv(adj, rz, *params["edge_decoder_conv"])
    r_edge = jax.nn.sigmoid(jnp.einsum("bnc,bmc->bnm", rre, rre))
    rxd = ref_gconv(adj, rz, *params["x_decoder_conv2"])
    rxr = ref_gconv(adj, rxd, *params["x_decoder_conv3"])

    assert jnp.allclose(recon_edge, r_edge, atol=1e-5)
    assert jnp.allclose(x_recon, rxr, atol=1e-5)
    assert jnp.allclose(z, rz, atol=1e-5)

    print("KERNEL_OK")
</pallas_src>

<mosaic_0001>
module attributes {stable_mosaic.version = 11 : i64} {
  func.func @_fused_autoencoder_kernel(%arg0: i32, %arg1: memref<1x16x16xf32, #tpu.memory_space<vmem>>, %arg2: memref<1x16x4xf32, #tpu.memory_space<vmem>>, %arg3: memref<4x8xf32, #tpu.memory_space<vmem>>, %arg4: memref<1x8xf32, #tpu.memory_space<vmem>>, %arg5: memref<8x16xf32, #tpu.memory_space<vmem>>, %arg6: memref<1x16xf32, #tpu.memory_space<vmem>>, %arg7: memref<16x8xf32, #tpu.memory_space<vmem>>, %arg8: memref<1x8xf32, #tpu.memory_space<vmem>>, %arg9: memref<16x8xf32, #tpu.memory_space<vmem>>, %arg10: memref<1x8xf32, #tpu.memory_space<vmem>>, %arg11: memref<8x4xf32, #tpu.memory_space<vmem>>, %arg12: memref<1x4xf32, #tpu.memory_space<vmem>>, %arg13: memref<1x16x16xf32, #tpu.memory_space<vmem>>, %arg14: memref<1x16x4xf32, #tpu.memory_space<vmem>>, %arg15: memref<1x16x16xf32, #tpu.memory_space<vmem>>) attributes {dimension_semantics = [#tpu.dimension_semantics<parallel>], iteration_bounds = array<i64: 2>, scalar_prefetch = 0 : i64, scratch_operands = 0 : i64, tpu.core_type = #tpu.core_type<tc>, window_params = [{transform_indices = @transform_0, window_bounds = array<i64: 1, 16, 16>}, {transform_indices = @transform_1, window_bounds = array<i64: 1, 16, 4>}, {pipeline_mode = #tpu.pipeline_mode<synchronous>, transform_indices = @transform_2, window_bounds = array<i64: 4, 8>}, {pipeline_mode = #tpu.pipeline_mode<synchronous>, transform_indices = @transform_3, window_bounds = array<i64: 1, 8>}, {pipeline_mode = #tpu.pipeline_mode<synchronous>, transform_indices = @transform_4, window_bounds = array<i64: 8, 16>}, {pipeline_mode = #tpu.pipeline_mode<synchronous>, transform_indices = @transform_5, window_bounds = array<i64: 1, 16>}, {pipeline_mode = #tpu.pipeline_mode<synchronous>, transform_indices = @transform_6, window_bounds = array<i64: 16, 8>}, {pipeline_mode = #tpu.pipeline_mode<synchronous>, transform_indices = @transform_7, window_bounds = array<i64: 1, 8>}, {pipeline_mode = #tpu.pipeline_mode<synchronous>, transform_indices = @transform_8, window_bounds = array<i64: 16, 8>}, {pipeline_mode = #tpu.pipeline_mode<synchronous>, transform_indices = @transform_9, window_bounds = array<i64: 1, 8>}, {pipeline_mode = #tpu.pipeline_mode<synchronous>, transform_indices = @transform_10, window_bounds = array<i64: 8, 4>}, {pipeline_mode = #tpu.pipeline_mode<synchronous>, transform_indices = @transform_11, window_bounds = array<i64: 1, 4>}, {transform_indices = @transform_12, window_bounds = array<i64: 1, 16, 16>}, {transform_indices = @transform_13, window_bounds = array<i64: 1, 16, 4>}, {transform_indices = @transform_14, window_bounds = array<i64: 1, 16, 16>}]} {
    %c0 = arith.constant 0 : index
    %c0_0 = arith.constant 0 : index
    %c0_1 = arith.constant 0 : index
    %0 = vector.load %arg1[%c0, %c0_0, %c0_1] : memref<1x16x16xf32, #tpu.memory_space<vmem>>, vector<1x16x16xf32>
    %1 = vector.shape_cast %0 : vector<1x16x16xf32> to vector<16x16xf32>
    %c0_2 = arith.constant 0 : index
    %c0_3 = arith.constant 0 : index
    %c0_4 = arith.constant 0 : index
    %2 = vector.load %arg2[%c0_2, %c0_3, %c0_4] : memref<1x16x4xf32, #tpu.memory_space<vmem>>, vector<1x16x4xf32>
    %3 = vector.shape_cast %2 : vector<1x16x4xf32> to vector<16x4xf32>
    %c0_5 = arith.constant 0 : index
    %c0_6 = arith.constant 0 : index
    %4 = vector.load %arg3[%c0_5, %c0_6] : memref<4x8xf32, #tpu.memory_space<vmem>>, vector<4x8xf32>
    %cst = arith.constant dense<0.000000e+00> : vector<16x8xf32>
    %5 = tpu.matmul %3, %4, %cst {dimension_numbers = #tpu.dot_dimension_numbers<[1], [0], [0], [1], [0, 0, 1, 1], [], []>} : vector<16x4xf32>, vector<4x8xf32>, vector<16x8xf32> -> vector<16x8xf32>
    %cst_7 = arith.constant dense<0.000000e+00> : vector<16x8xf32>
    %6 = tpu.matmul %1, %5, %cst_7 {dimension_numbers = #tpu.dot_dimension_numbers<[1], [0], [0], [1], [0, 0, 1, 1], [], []>} : vector<16x16xf32>, vector<16x8xf32>, vector<16x8xf32> -> vector<16x8xf32>
    %c0_8 = arith.constant 0 : index
    %c0_9 = arith.constant 0 : index
    %7 = vector.load %arg4[%c0_8, %c0_9] : memref<1x8xf32, #tpu.memory_space<vmem>>, vector<1x8xf32>
    %8 = vector.broadcast %7 : vector<1x8xf32> to vector<16x8xf32>
    %9 = arith.addf %6, %8 : vector<16x8xf32>
    %cst_10 = arith.constant 0.000000e+00 : f32
    %10 = vector.broadcast %cst_10 : f32 to vector<16x8xf32>
    %11 = arith.cmpf oge, %9, %10 : vector<16x8xf32>
    %cst_11 = arith.constant 0.00999999977 : f32
    %12 = vector.broadcast %cst_11 : f32 to vector<16x8xf32>
    %13 = arith.mulf %12, %9 : vector<16x8xf32>
    %14 = arith.select %11, %9, %13 : vector<16x8xi1>, vector<16x8xf32>
    %c0_12 = arith.constant 0 : index
    %c0_13 = arith.constant 0 : index
    %15 = vector.load %arg5[%c0_12, %c0_13] : memref<8x16xf32, #tpu.memory_space<vmem>>, vector<8x16xf32>
    %cst_14 = arith.constant dense<0.000000e+00> : vector<16x16xf32>
    %16 = tpu.matmul %14, %15, %cst_14 {dimension_numbers = #tpu.dot_dimension_numbers<[1], [0], [0], [1], [0, 0, 1, 1], [], []>} : vector<16x8xf32>, vector<8x16xf32>, vector<16x16xf32> -> vector<16x16xf32>
    %cst_15 = arith.constant dense<0.000000e+00> : vector<16x16xf32>
    %17 = tpu.matmul %1, %16, %cst_15 {dimension_numbers = #tpu.dot_dimension_numbers<[1], [0], [0], [1], [0, 0, 1, 1], [], []>} : vector<16x16xf32>, vector<16x16xf32>, vector<16x16xf32> -> vector<16x16xf32>
    %c0_16 = arith.constant 0 : index
    %c0_17 = arith.constant 0 : index
    %18 = vector.load %arg6[%c0_16, %c0_17] : memref<1x16xf32, #tpu.memory_space<vmem>>, vector<1x16xf32>
    %19 = vector.broadcast %18 : vector<1x16xf32> to vector<16x16xf32>
    %20 = arith.addf %17, %19 : vector<16x16xf32>
    %cst_18 = arith.constant 0.000000e+00 : f32
    %21 = vector.broadcast %cst_18 : f32 to vector<16x16xf32>
    %22 = arith.cmpf oge, %20, %21 : vector<16x16xf32>
    %cst_19 = arith.constant 0.00999999977 : f32
    %23 = vector.broadcast %cst_19 : f32 to vector<16x16xf32>
    %24 = arith.mulf %23, %20 : vector<16x16xf32>
    %25 = arith.select %22, %20, %24 : vector<16x16xi1>, vector<16x16xf32>
    %c0_20 = arith.constant 0 : index
    %c0_21 = arith.constant 0 : index
    %26 = vector.load %arg7[%c0_20, %c0_21] : memref<16x8xf32, #tpu.memory_space<vmem>>, vector<16x8xf32>
    %cst_22 = arith.constant dense<0.000000e+00> : vector<16x8xf32>
    %27 = tpu.matmul %25, %26, %cst_22 {dimension_numbers = #tpu.dot_dimension_numbers<[1], [0], [0], [1], [0, 0, 1, 1], [], []>} : vector<16x16xf32>, vector<16x8xf32>, vector<16x8xf32> -> vector<16x8xf32>
    %cst_23 = arith.constant dense<0.000000e+00> : vector<16x8xf32>
    %28 = tpu.matmul %1, %27, %cst_23 {dimension_numbers = #tpu.dot_dimension_numbers<[1], [0], [0], [1], [0, 0, 1, 1], [], []>} : vector<16x16xf32>, vector<16x8xf32>, vector<16x8xf32> -> vector<16x8xf32>
    %c0_24 = arith.constant 0 : index
    %c0_25 = arith.constant 0 : index
    %29 = vector.load %arg8[%c0_24, %c0_25] : memref<1x8xf32, #tpu.memory_space<vmem>>, vector<1x8xf32>
    %30 = vector.broadcast %29 : vector<1x8xf32> to vector<16x8xf32>
    %31 = arith.addf %28, %30 : vector<16x8xf32>
    %cst_26 = arith.constant 0.000000e+00 : f32
    %32 = vector.broadcast %cst_26 : f32 to vector<16x8xf32>
    %33 = arith.cmpf oge, %31, %32 : vector<16x8xf32>
    %cst_27 = arith.constant 0.00999999977 : f32
    %34 = vector.broadcast %cst_27 : f32 to vector<16x8xf32>
    %35 = arith.mulf %34, %31 : vector<16x8xf32>
    %36 = arith.select %33, %31, %35 : vector<16x8xi1>, vector<16x8xf32>
    %cst_28 = arith.constant dense<0.000000e+00> : vector<16x16xf32>
    %37 = tpu.matmul %36, %36, %cst_28 {dimension_numbers = #tpu.dot_dimension_numbers<[1], [1], [0], [0], [0, 0, 1, 0], [], []>} : vector<16x8xf32>, vector<16x8xf32>, vector<16x16xf32> -> vector<16x16xf32>
    %38 = arith.negf %37 : vector<16x16xf32>
    %39 = math.exp %38 : vector<16x16xf32>
    %cst_29 = arith.constant 1.000000e+00 : f32
    %40 = vector.broadcast %cst_29 : f32 to vector<16x16xf32>
    %41 = arith.addf %40, %39 : vector<16x16xf32>
    %42 = arith.divf %40, %41 : vector<16x16xf32>
    %c0_30 = arith.constant 0 : index
    %c0_31 = arith.constant 0 : index
    %c0_32 = arith.constant 0 : index
    %43 = vector.load %arg13[%c0_30, %c0_31, %c0_32] : memref<1x16x16xf32, #tpu.memory_space<vmem>>, vector<1x16x16xf32>
    %44 = vector.shape_cast %43 : vector<1x16x16xf32> to vector<16x16xf32>
    %45 = vector.shape_cast %42 : vector<16x16xf32> to vector<1x16x16xf32>
    tpu.vector_store %arg13[%c0_30, %c0_31, %c0_32], %45 {strides = array<i32>} : memref<1x16x16xf32, #tpu.memory_space<vmem>>, vector<1x16x16xf32>,
    %c0_33 = arith.constant 0 : index
    %c0_34 = arith.constant 0 : index
    %46 = vector.load %arg9[%c0_33, %c0_34] : memref<16x8xf32, #tpu.memory_space<vmem>>, vector<16x8xf32>
    %cst_35 = arith.constant dense<0.000000e+00> : vector<16x8xf32>
    %47 = tpu.matmul %25, %46, %cst_35 {dimension_numbers = #tpu.dot_dimension_numbers<[1], [0], [0], [1], [0, 0, 1, 1], [], []>} : vector<16x16xf32>, vector<16x8xf32>, vector<16x8xf32> -> vector<16x8xf32>
    %cst_36 = arith.constant dense<0.000000e+00> : vector<16x8xf32>
    %48 = tpu.matmul %1, %47, %cst_36 {dimension_numbers = #tpu.dot_dimension_numbers<[1], [0], [0], [1], [0, 0, 1, 1], [], []>} : vector<16x16xf32>, vector<16x8xf32>, vector<16x8xf32> -> vector<16x8xf32>
    %c0_37 = arith.constant 0 : index
    %c0_38 = arith.constant 0 : index
    %49 = vector.load %arg10[%c0_37, %c0_38] : memref<1x8xf32, #tpu.memory_space<vmem>>, vector<1x8xf32>
    %50 = vector.broadcast %49 : vector<1x8xf32> to vector<16x8xf32>
    %51 = arith.addf %48, %50 : vector<16x8xf32>
    %cst_39 = arith.constant 0.000000e+00 : f32
    %52 = vector.broadcast %cst_39 : f32 to vector<16x8xf32>
    %53 = arith.cmpf oge, %51, %52 : vector<16x8xf32>
    %cst_40 = arith.constant 0.00999999977 : f32
    %54 = vector.broadcast %cst_40 : f32 to vector<16x8xf32>
    %55 = arith.mulf %54, %51 : vector<16x8xf32>
    %56 = arith.select %53, %51, %55 : vector<16x8xi1>, vector<16x8xf32>
    %c0_41 = arith.constant 0 : index
    %c0_42 = arith.constant 0 : index
    %57 = vector.load %arg11[%c0_41, %c0_42] : memref<8x4xf32, #tpu.memory_space<vmem>>, vector<8x4xf32>
    %cst_43 = arith.constant dense<0.000000e+00> : vector<16x4xf32>
    %58 = tpu.matmul %56, %57, %cst_43 {dimension_numbers = #tpu.dot_dimension_numbers<[1], [0], [0], [1], [0, 0, 1, 1], [], []>} : vector<16x8xf32>, vector<8x4xf32>, vector<16x4xf32> -> vector<16x4xf32>
    %cst_44 = arith.constant dense<0.000000e+00> : vector<16x4xf32>
    %59 = tpu.matmul %1, %58, %cst_44 {dimension_numbers = #tpu.dot_dimension_numbers<[1], [0], [0], [1], [0, 0, 1, 1], [], []>} : vector<16x16xf32>, vector<16x4xf32>, vector<16x4xf32> -> vector<16x4xf32>
    %c0_45 = arith.constant 0 : index
    %c0_46 = arith.constant 0 : index
    %60 = vector.load %arg12[%c0_45, %c0_46] : memref<1x4xf32, #tpu.memory_space<vmem>>, vector<1x4xf32>
    %61 = vector.broadcast %60 : vector<1x4xf32> to vector<16x4xf32>
    %62 = arith.addf %59, %61 : vector<16x4xf32>
    %cst_47 = arith.constant 0.000000e+00 : f32
    %63 = vector.broadcast %cst_47 : f32 to vector<16x4xf32>
    %64 = arith.cmpf oge, %62, %63 : vector<16x4xf32>
    %cst_48 = arith.constant 0.00999999977 : f32
    %65 = vector.broadcast %cst_48 : f32 to vector<16x4xf32>
    %66 = arith.mulf %65, %62 : vector<16x4xf32>
    %67 = arith.select %64, %62, %66 : vector<16x4xi1>, vector<16x4xf32>
    %c0_49 = arith.constant 0 : index
    %c0_50 = arith.constant 0 : index
    %c0_51 = arith.constant 0 : index
    %68 = vector.load %arg14[%c0_49, %c0_50, %c0_51] : memref<1x16x4xf32, #tpu.memory_space<vmem>>, vector<1x16x4xf32>
    %69 = vector.shape_cast %68 : vector<1x16x4xf32> to vector<16x4xf32>
    %70 = vector.shape_cast %67 : vector<16x4xf32> to vector<1x16x4xf32>
    tpu.vector_store %arg14[%c0_49, %c0_50, %c0_51], %70 {strides = array<i32>} : memref<1x16x4xf32, #tpu.memory_space<vmem>>, vector<1x16x4xf32>,
    %c0_52 = arith.constant 0 : index
    %c0_53 = arith.constant 0 : index
    %c0_54 = arith.constant 0 : index
    %71 = vector.load %arg15[%c0_52, %c0_53, %c0_54] : memref<1x16x16xf32, #tpu.memory_space<vmem>>, vector<1x16x16xf32>
    %72 = vector.shape_cast %71 : vector<1x16x16xf32> to vector<16x16xf32>
    %73 = vector.shape_cast %25 : vector<16x16xf32> to vector<1x16x16xf32>
    tpu.vector_store %arg15[%c0_52, %c0_53, %c0_54], %73 {strides = array<i32>} : memref<1x16x16xf32, #tpu.memory_space<vmem>>, vector<1x16x16xf32>,
    return
  }
  func.func @transform_0(%arg0: i32) -> (i32, i32, i32) {
    %c0_i32 = arith.constant 0 : i32
    %c0_i32_0 = arith.constant 0 : i32
    %c0_i32_1 = arith.constant 0 : i32
    return %arg0, %c0_i32, %c0_i32_0 : i32, i32, i32
  }
  func.func @transform_1(%arg0: i32) -> (i32, i32, i32) {
    %c0_i32 = arith.constant 0 : i32
    %c0_i32_0 = arith.constant 0 : i32
    %c0_i32_1 = arith.constant 0 : i32
    return %arg0, %c0_i32, %c0_i32_0 : i32, i32, i32
  }
  func.func @transform_2(%arg0: i32) -> (i32, i32) {
    %c0_i32 = arith.constant 0 : i32
    %c0_i32_0 = arith.constant 0 : i32
    %c0_i32_1 = arith.constant 0 : i32
    return %c0_i32, %c0_i32_0 : i32, i32
  }
  func.func @transform_3(%arg0: i32) -> (i32, i32) {
    %c0_i32 = arith.constant 0 : i32
    %c0_i32_0 = arith.constant 0 : i32
    %c0_i32_1 = arith.constant 0 : i32
    return %c0_i32, %c0_i32_0 : i32, i32
  }
  func.func @transform_4(%arg0: i32) -> (i32, i32) {
    %c0_i32 = arith.constant 0 : i32
    %c0_i32_0 = arith.constant 0 : i32
    %c0_i32_1 = arith.constant 0 : i32
    return %c0_i32, %c0_i32_0 : i32, i32
  }
  func.func @transform_5(%arg0: i32) -> (i32, i32) {
    %c0_i32 = arith.constant 0 : i32
    %c0_i32_0 = arith.constant 0 : i32
    %c0_i32_1 = arith.constant 0 : i32
    return %c0_i32, %c0_i32_0 : i32, i32
  }
  func.func @transform_6(%arg0: i32) -> (i32, i32) {
    %c0_i32 = arith.constant 0 : i32
    %c0_i32_0 = arith.constant 0 : i32
    %c0_i32_1 = arith.constant 0 : i32
    return %c0_i32, %c0_i32_0 : i32, i32
  }
  func.func @transform_7(%arg0: i32) -> (i32, i32) {
    %c0_i32 = arith.constant 0 : i32
    %c0_i32_0 = arith.constant 0 : i32
    %c0_i32_1 = arith.constant 0 : i32
    return %c0_i32, %c0_i32_0 : i32, i32
  }
  func.func @transform_8(%arg0: i32) -> (i32, i32) {
    %c0_i32 = arith.constant 0 : i32
    %c0_i32_0 = arith.constant 0 : i32
    %c0_i32_1 = arith.constant 0 : i32
    return %c0_i32, %c0_i32_0 : i32, i32
  }
  func.func @transform_9(%arg0: i32) -> (i32, i32) {
    %c0_i32 = arith.constant 0 : i32
    %c0_i32_0 = arith.constant 0 : i32
    %c0_i32_1 = arith.constant 0 : i32
    return %c0_i32, %c0_i32_0 : i32, i32
  }
  func.func @transform_10(%arg0: i32) -> (i32, i32) {
    %c0_i32 = arith.constant 0 : i32
    %c0_i32_0 = arith.constant 0 : i32
    %c0_i32_1 = arith.constant 0 : i32
    return %c0_i32, %c0_i32_0 : i32, i32
  }
  func.func @transform_11(%arg0: i32) -> (i32, i32) {
    %c0_i32 = arith.constant 0 : i32
    %c0_i32_0 = arith.constant 0 : i32
    %c0_i32_1 = arith.constant 0 : i32
    return %c0_i32, %c0_i32_0 : i32, i32
  }
  func.func @transform_12(%arg0: i32) -> (i32, i32, i32) {
    %c0_i32 = arith.constant 0 : i32
    %c0_i32_0 = arith.constant 0 : i32
    %c0_i32_1 = arith.constant 0 : i32
    return %arg0, %c0_i32, %c0_i32_0 : i32, i32, i32
  }
  func.func @transform_13(%arg0: i32) -> (i32, i32, i32) {
    %c0_i32 = arith.constant 0 : i32
    %c0_i32_0 = arith.constant 0 : i32
    %c0_i32_1 = arith.constant 0 : i32
    return %arg0, %c0_i32, %c0_i32_0 : i32, i32, i32
  }
  func.func @transform_14(%arg0: i32) -> (i32, i32, i32) {
    %c0_i32 = arith.constant 0 : i32
    %c0_i32_0 = arith.constant 0 : i32
    %c0_i32_1 = arith.constant 0 : i32
    return %arg0, %c0_i32, %c0_i32_0 : i32, i32, i32
  }
}

</mosaic_0001>

<llo_original>
// kernel: _forward.1
$region0: #{_forward.1}
  #allocation0 [shape = 'u32[]', space=smem, size = 0x4, offset = 0x4, fixed_abs, tag = 'smem constant byte address 0x4 - core index']
  #allocation1 [shape = 'u32[144,128]{1,0:T(1,128)}', space=vmem, size = 0x12000, scoped, tag = 'internal scratch']
  %s0 = inlined_call_operand.vmem [shape: f32[2,16,16], index: 0, kind: input, shape index: {}]
  %s1 = inlined_call_operand.vmem [shape: f32[2,16,4], index: 1, kind: input, shape index: {}]
  %s2 = inlined_call_operand.vmem [shape: f32[4,8], index: 2, kind: input, shape index: {}]
  %s3 = inlined_call_operand.vmem [shape: f32[1,8], index: 3, kind: input, shape index: {}]
  %s4 = inlined_call_operand.vmem [shape: f32[8,16], index: 4, kind: input, shape index: {}]
  %s5 = inlined_call_operand.vmem [shape: f32[1,16], index: 5, kind: input, shape index: {}]
  %s6 = inlined_call_operand.vmem [shape: f32[16,8], index: 6, kind: input, shape index: {}]
  %s7 = inlined_call_operand.vmem [shape: f32[1,8], index: 7, kind: input, shape index: {}]
  %s8 = inlined_call_operand.vmem [shape: f32[16,8], index: 8, kind: input, shape index: {}]
  %s9 = inlined_call_operand.vmem [shape: f32[1,8], index: 9, kind: input, shape index: {}]
  %s10 = inlined_call_operand.vmem [shape: f32[8,4], index: 10, kind: input, shape index: {}]
  %s11 = inlined_call_operand.vmem [shape: f32[1,4], index: 11, kind: input, shape index: {}]
  %s12 = inlined_call_operand.hbm [shape: f32[2,16,16], index: 12, kind: output, shape index: {0}]
  %s13 = inlined_call_operand.vmem [shape: f32[2,16,4], index: 13, kind: output, shape index: {1}]
  %s14 = inlined_call_operand.hbm [shape: f32[2,16,16], index: 14, kind: output, shape index: {2}]
  %15 = xla_tuple %s12, %s13, %s14
  %s16 = sld [smem:[#allocation0]]
  $region97: #{_forward.1} parent=0
    _
  %s18 = ssub.s32 1, %s16
  %s19 = scalar_select 0, %s18, %s16
  $region1: #{_forward.1} parent=0
    #allocation2 [shape = 'u8[16384]{0}', space=vmem, size = 0x4000, scoped, tag = 'output window, operand 0']
    #allocation3 [shape = 's32[2]{0}', space=sflag, size = 0x8, scoped, tag = 'scoped memory for _forward.1']
    #allocation4 [shape = 'u8[16384]{0}', space=vmem, size = 0x4000, scoped, tag = 'output window, operand 2']
    #allocation5 [shape = 's32[2]{0}', space=sflag, size = 0x8, scoped, tag = 'scoped memory for _forward.1']
    %20 = vsyncpa [#allocation3], 0
    %s21 = scalar_lea.sflag [#allocation3], 1
    %22 = vsyncpa %s21, 0
    %23 = vsyncpa [#allocation5], 0
    %s24 = scalar_lea.sflag [#allocation5], 1
    %25 = vsyncpa %s24, 0
    loop: start=0, step=1, limit=4
    $region2: #{_forward.1} parent=1 // loop_pre_header
      _
    $region3: #{_forward.1} parent=1 // loop_header
      %s27 = sphi 0, %s31
      %p28 = scmp.ge.s32.totalorder %s27, 4
      %s37 = sphi 0, %s39
      %s40 = sphi 0, %s37
      %s41 = sphi 0, %s40
      %s57 = sphi 0, %s41
      %s63 = sphi 0, %s65
      %s66 = sphi 0, %s63
      %s67 = sphi 0, %s66
      %s83 = sphi 0, %s67
      %s87 = sphi 0, %s87
      %s89 = sphi 0, %s87
      %s90 = sphi 0, %s89
      %s104 = sphi 0, %s90
      %s108 = sphi 0, %s108
      %s110 = sphi 0, %s108
      %s111 = sphi 0, %s110
      %s125 = sphi 0, %s111
      %s129 = sphi 0, %s129
      %s131 = sphi 0, %s129
      %s132 = sphi 0, %s131
      %s146 = sphi 0, %s132
      %s150 = sphi 0, %s150
      %s152 = sphi 0, %s150
      %s153 = sphi 0, %s152
      %s167 = sphi 0, %s153
      %s171 = sphi 0, %s171
      %s173 = sphi 0, %s171
      %s174 = sphi 0, %s173
      %s188 = sphi 0, %s174
      %s192 = sphi 0, %s192
      %s194 = sphi 0, %s192
      %s195 = sphi 0, %s194
      %s209 = sphi 0, %s195
      %s213 = sphi 0, %s213
      %s215 = sphi 0, %s213
      %s216 = sphi 0, %s215
      %s230 = sphi 0, %s216
      %s234 = sphi 0, %s234
      %s236 = sphi 0, %s234
      %s237 = sphi 0, %s236
      %s251 = sphi 0, %s237
      %s255 = sphi 0, %s255
      %s257 = sphi 0, %s255
      %s258 = sphi 0, %s257
      %s272 = sphi 0, %s258
      %s276 = sphi 0, %s276
      %s278 = sphi 0, %s276
      %s279 = sphi 0, %s278
      %s293 = sphi 0, %s279
      %s299 = sphi 0, %s301
      %s302 = sphi 0, %s299
      %s303 = sphi 0, %s302
      %s319 = sphi 0, %s303
      %s325 = sphi 0, %s327
      %s328 = sphi 0, %s325
      %s329 = sphi 0, %s328
      %s345 = sphi 0, %s329
      %s351 = sphi 0, %s353
      %s354 = sphi 0, %s351
      %s355 = sphi 0, %s354
      %s371 = sphi 0, %s355
    $region4: #{_forward.1} parent=1 // loop_header_branch
      %30 = sbr.rel (%p28) target = $region8
    $region5: #{_forward.1} parent=1 // loop_body
      %s32 = ssub.s32 %s27, 1
      %s33 = ssub.s32 %s27, 2
      %s34 = sadd.s32 %s27, 1
      %s35 = ssub.s32 %s27, %s34
      %p36 = scmp.eq.s32.totalorder %s35, 0
      %s38 = sadd.s32 %s37, 1
      %s39 = scalar_select %p36, %s37, %s38
      %p42 = pneg %p36
      %p43 = scmp.eq.s32.totalorder %s27, 1
      %p44 = por %p42, %p43
      %p45 = scmp.ne.s32.totalorder %s37, %s40
      %p46 = scmp.eq.s32.totalorder %s27, 0
      %p47 = por %p45, %p46
      %p48 = scmp.ne.s32.totalorder %s37, %s40
      %p49 = scmp.eq.s32.totalorder %s32, 1
      %p50 = por %p48, %p49
      %p51 = scmp.ne.s32.totalorder %s40, %s41
      %p52 = scmp.eq.s32.totalorder %s32, 0
      %p53 = por %p51, %p52
      %p54 = scmp.ne.s32.totalorder %s40, %s41
      %p55 = scmp.eq.s32.totalorder %s33, 1
      %p56 = por %p54, %p55
      %p58 = scmp.ne.s32.totalorder %s41, %s57
      %p59 = scmp.eq.s32.totalorder %s33, 0
      %p60 = por %p58, %p59
      %s61 = ssub.s32 %s27, %s34
      %p62 = scmp.eq.s32.totalorder %s61, 0
      %s64 = sadd.s32 %s63, 1
      %s65 = scalar_select %p62, %s63, %s64
      %p68 = pneg %p62
      %p69 = scmp.eq.s32.totalorder %s27, 1
      %p70 = por %p68, %p69
      %p71 = scmp.ne.s32.totalorder %s63, %s66
      %p72 = scmp.eq.s32.totalorder %s27, 0
      %p73 = por %p71, %p72
      %p74 = scmp.ne.s32.totalorder %s63, %s66
      %p75 = scmp.eq.s32.totalorder %s32, 1
      %p76 = por %p74, %p75
      %p77 = scmp.ne.s32.totalorder %s66, %s67
      %p78 = scmp.eq.s32.totalorder %s32, 0
      %p79 = por %p77, %p78
      %p80 = scmp.ne.s32.totalorder %s66, %s67
      %p81 = scmp.eq.s32.totalorder %s33, 1
      %p82 = por %p80, %p81
      %p84 = scmp.ne.s32.totalorder %s67, %s83
      %p85 = scmp.eq.s32.totalorder %s33, 0
      %p86 = por %p84, %p85
      %s88 = sadd.s32 %s87, 1
      %p91 = scmp.eq.s32.totalorder %s27, 1
      %p92 = scmp.ne.s32.totalorder %s87, %s89
      %p93 = scmp.eq.s32.totalorder %s27, 0
      %p94 = por %p92, %p93
      %p95 = scmp.ne.s32.totalorder %s87, %s89
      %p96 = scmp.eq.s32.totalorder %s32, 1
      %p97 = por %p95, %p96
      %p98 = scmp.ne.s32.totalorder %s89, %s90
      %p99 = scmp.eq.s32.totalorder %s32, 0
      %p100 = por %p98, %p99
      %p101 = scmp.ne.s32.totalorder %s89, %s90
      %p102 = scmp.eq.s32.totalorder %s33, 1
      %p103 = por %p101, %p102
      %p105 = scmp.ne.s32.totalorder %s90, %s104
      %p106 = scmp.eq.s32.totalorder %s33, 0
      %p107 = por %p105, %p106
      %s109 = sadd.s32 %s108, 1
      %p112 = scmp.eq.s32.totalorder %s27, 1
      %p113 = scmp.ne.s32.totalorder %s108, %s110
      %p114 = scmp.eq.s32.totalorder %s27, 0
      %p115 = por %p113, %p114
      %p116 = scmp.ne.s32.totalorder %s108, %s110
      %p117 = scmp.eq.s32.totalorder %s32, 1
      %p118 = por %p116, %p117
      %p119 = scmp.ne.s32.totalorder %s110, %s111
      %p120 = scmp.eq.s32.totalorder %s32, 0
      %p121 = por %p119, %p120
      %p122 = scmp.ne.s32.totalorder %s110, %s111
      %p123 = scmp.eq.s32.totalorder %s33, 1
      %p124 = por %p122, %p123
      %p126 = scmp.ne.s32.totalorder %s111, %s125
      %p127 = scmp.eq.s32.totalorder %s33, 0
      %p128 = por %p126, %p127
      %s130 = sadd.s32 %s129, 1
      %p133 = scmp.eq.s32.totalorder %s27, 1
      %p134 = scmp.ne.s32.totalorder %s129, %s131
      %p135 = scmp.eq.s32.totalorder %s27, 0
      %p136 = por %p134, %p135
      %p137 = scmp.ne.s32.totalorder %s129, %s131
      %p138 = scmp.eq.s32.totalorder %s32, 1
      %p139 = por %p137, %p138
      %p140 = scmp.ne.s32.totalorder %s131, %s132
      %p141 = scmp.eq.s32.totalorder %s32, 0
      %p142 = por %p140, %p141
      %p143 = scmp.ne.s32.totalorder %s131, %s132
      %p144 = scmp.eq.s32.totalorder %s33, 1
      %p145 = por %p143, %p144
      %p147 = scmp.ne.s32.totalorder %s132, %s146
      %p148 = scmp.eq.s32.totalorder %s33, 0
      %p149 = por %p147, %p148
      %s151 = sadd.s32 %s150, 1
      %p154 = scmp.eq.s32.totalorder %s27, 1
      %p155 = scmp.ne.s32.totalorder %s150, %s152
      %p156 = scmp.eq.s32.totalorder %s27, 0
      %p157 = por %p155, %p156
      %p158 = scmp.ne.s32.totalorder %s150, %s152
      %p159 = scmp.eq.s32.totalorder %s32, 1
      %p160 = por %p158, %p159
      %p161 = scmp.ne.s32.totalorder %s152, %s153
      %p162 = scmp.eq.s32.totalorder %s32, 0
      %p163 = por %p161, %p162
      %p164 = scmp.ne.s32.totalorder %s152, %s153
      %p165 = scmp.eq.s32.totalorder %s33, 1
      %p166 = por %p164, %p165
      %p168 = scmp.ne.s32.totalorder %s153, %s167
      %p169 = scmp.eq.s32.totalorder %s33, 0
      %p170 = por %p168, %p169
      %s172 = sadd.s32 %s171, 1
      %p175 = scmp.eq.s32.totalorder %s27, 1
      %p176 = scmp.ne.s32.totalorder %s171, %s173
      %p177 = scmp.eq.s32.totalorder %s27, 0
      %p178 = por %p176, %p177
      %p179 = scmp.ne.s32.totalorder %s171, %s173
      %p180 = scmp.eq.s32.totalorder %s32, 1
      %p181 = por %p179, %p180
      %p182 = scmp.ne.s32.totalorder %s173, %s174
      %p183 = scmp.eq.s32.totalorder %s32, 0
      %p184 = por %p182, %p183
      %p185 = scmp.ne.s32.totalorder %s173, %s174
      %p186 = scmp.eq.s32.totalorder %s33, 1
      %p187 = por %p185, %p186
      %p189 = scmp.ne.s32.totalorder %s174, %s188
      %p190 = scmp.eq.s32.totalorder %s33, 0
      %p191 = por %p189, %p190
      %s193 = sadd.s32 %s192, 1
      %p196 = scmp.eq.s32.totalorder %s27, 1
      %p197 = scmp.ne.s32.totalorder %s192, %s194
      %p198 = scmp.eq.s32.totalorder %s27, 0
      %p199 = por %p197, %p198
      %p200 = scmp.ne.s32.totalorder %s192, %s194
      %p201 = scmp.eq.s32.totalorder %s32, 1
      %p202 = por %p200, %p201
      %p203 = scmp.ne.s32.totalorder %s194, %s195
      %p204 = scmp.eq.s32.totalorder %s32, 0
      %p205 = por %p203, %p204
      %p206 = scmp.ne.s32.totalorder %s194, %s195
      %p207 = scmp.eq.s32.totalorder %s33, 1
      %p208 = por %p206, %p207
      %p210 = scmp.ne.s32.totalorder %s195, %s209
      %p211 = scmp.eq.s32.totalorder %s33, 0
      %p212 = por %p210, %p211
      %s214 = sadd.s32 %s213, 1
      %p217 = scmp.eq.s32.totalorder %s27, 1
      %p218 = scmp.ne.s32.totalorder %s213, %s215
      %p219 = scmp.eq.s32.totalorder %s27, 0
      %p220 = por %p218, %p219
      %p221 = scmp.ne.s32.totalorder %s213, %s215
      %p222 = scmp.eq.s32.totalorder %s32, 1
      %p223 = por %p221, %p222
      %p224 = scmp.ne.s32.totalorder %s215, %s216
      %p225 = scmp.eq.s32.totalorder %s32, 0
      %p226 = por %p224, %p225
      %p227 = scmp.ne.s32.totalorder %s215, %s216
      %p228 = scmp.eq.s32.totalorder %s33, 1
      %p229 = por %p227, %p228
      %p231 = scmp.ne.s32.totalorder %s216, %s230
      %p232 = scmp.eq.s32.totalorder %s33, 0
      %p233 = por %p231, %p232
      %s235 = sadd.s32 %s234, 1
      %p238 = scmp.eq.s32.totalorder %s27, 1
      %p239 = scmp.ne.s32.totalorder %s234, %s236
      %p240 = scmp.eq.s32.totalorder %s27, 0
      %p241 = por %p239, %p240
      %p242 = scmp.ne.s32.totalorder %s234, %s236
      %p243 = scmp.eq.s32.totalorder %s32, 1
      %p244 = por %p242, %p243
      %p245 = scmp.ne.s32.totalorder %s236, %s237
      %p246 = scmp.eq.s32.totalorder %s32, 0
      %p247 = por %p245, %p246
      %p248 = scmp.ne.s32.totalorder %s236, %s237
      %p249 = scmp.eq.s32.totalorder %s33, 1
      %p250 = por %p248, %p249
      %p252 = scmp.ne.s32.totalorder %s237, %s251
      %p253 = scmp.eq.s32.totalorder %s33, 0
      %p254 = por %p252, %p253
      %s256 = sadd.s32 %s255, 1
      %p259 = scmp.eq.s32.totalorder %s27, 1
      %p260 = scmp.ne.s32.totalorder %s255, %s257
      %p261 = scmp.eq.s32.totalorder %s27, 0
      %p262 = por %p260, %p261
      %p263 = scmp.ne.s32.totalorder %s255, %s257
      %p264 = scmp.eq.s32.totalorder %s32, 1
      %p265 = por %p263, %p264
      %p266 = scmp.ne.s32.totalorder %s257, %s258
      %p267 = scmp.eq.s32.totalorder %s32, 0
      %p268 = por %p266, %p267
      %p269 = scmp.ne.s32.totalorder %s257, %s258
      %p270 = scmp.eq.s32.totalorder %s33, 1
      %p271 = por %p269, %p270
      %p273 = scmp.ne.s32.totalorder %s258, %s272
      %p274 = scmp.eq.s32.totalorder %s33, 0
      %p275 = por %p273, %p274
      %s277 = sadd.s32 %s276, 1
      %p280 = scmp.eq.s32.totalorder %s27, 1
      %p281 = scmp.ne.s32.totalorder %s276, %s278
      %p282 = scmp.eq.s32.totalorder %s27, 0
      %p283 = por %p281, %p282
      %p284 = scmp.ne.s32.totalorder %s276, %s278
      %p285 = scmp.eq.s32.totalorder %s32, 1
      %p286 = por %p284, %p285
      %p287 = scmp.ne.s32.totalorder %s278, %s279
      %p288 = scmp.eq.s32.totalorder %s32, 0
      %p289 = por %p287, %p288
      %p290 = scmp.ne.s32.totalorder %s278, %s279
      %p291 = scmp.eq.s32.totalorder %s33, 1
      %p292 = por %p290, %p291
      %p294 = scmp.ne.s32.totalorder %s279, %s293
      %p295 = scmp.eq.s32.totalorder %s33, 0
      %p296 = por %p294, %p295
      %s297 = ssub.s32 %s27, %s34
      %p298 = scmp.eq.s32.totalorder %s297, 0
      %s300 = sadd.s32 %s299, 1
      %s301 = scalar_select %p298, %s299, %s300
      %p304 = pneg %p298
      %p305 = scmp.eq.s32.totalorder %s27, 1
      %p306 = por %p304, %p305
      %p307 = scmp.ne.s32.totalorder %s299, %s302
      %p308 = scmp.eq.s32.totalorder %s27, 0
      %p309 = por %p307, %p308
      %p310 = scmp.ne.s32.totalorder %s299, %s302
      %p311 = scmp.eq.s32.totalorder %s32, 1
      %p312 = por %p310, %p311
      %p313 = scmp.ne.s32.totalorder %s302, %s303
      %p314 = scmp.eq.s32.totalorder %s32, 0
      %p315 = por %p313, %p314
      %p316 = scmp.ne.s32.totalorder %s302, %s303
      %p317 = scmp.eq.s32.totalorder %s33, 1
      %p318 = por %p316, %p317
      %p320 = scmp.ne.s32.totalorder %s303, %s319
      %p321 = scmp.eq.s32.totalorder %s33, 0
      %p322 = por %p320, %p321
      %s323 = ssub.s32 %s27, %s34
      %p324 = scmp.eq.s32.totalorder %s323, 0
      %s326 = sadd.s32 %s325, 1
      %s327 = scalar_select %p324, %s325, %s326
      %p330 = pneg %p324
      %p331 = scmp.eq.s32.totalorder %s27, 1
      %p332 = por %p330, %p331
      %p333 = scmp.ne.s32.totalorder %s325, %s328
      %p334 = scmp.eq.s32.totalorder %s27, 0
      %p335 = por %p333, %p334
      %p336 = scmp.ne.s32.totalorder %s325, %s328
      %p337 = scmp.eq.s32.totalorder %s32, 1
      %p338 = por %p336, %p337
      %p339 = scmp.ne.s32.totalorder %s328, %s329
      %p340 = scmp.eq.s32.totalorder %s32, 0
      %p341 = por %p339, %p340
      %p342 = scmp.ne.s32.totalorder %s328, %s329
      %p343 = scmp.eq.s32.totalorder %s33, 1
      %p344 = por %p342, %p343
      %p346 = scmp.ne.s32.totalorder %s329, %s345
      %p347 = scmp.eq.s32.totalorder %s33, 0
      %p348 = por %p346, %p347
      %s349 = ssub.s32 %s27, %s34
      %p350 = scmp.eq.s32.totalorder %s349, 0
      %s352 = sadd.s32 %s351, 1
      %s353 = scalar_select %p350, %s351, %s352
      %p356 = pneg %p350
      %p357 = scmp.eq.s32.totalorder %s27, 1
      %p358 = por %p356, %p357
      %p359 = scmp.ne.s32.totalorder %s351, %s354
      %p360 = scmp.eq.s32.totalorder %s27, 0
      %p361 = por %p359, %p360
      %p362 = scmp.ne.s32.totalorder %s351, %s354
      %p363 = scmp.eq.s32.totalorder %s32, 1
      %p364 = por %p362, %p363
      %p365 = scmp.ne.s32.totalorder %s354, %s355
      %p366 = scmp.eq.s32.totalorder %s32, 0
      %p367 = por %p365, %p366
      %p368 = scmp.ne.s32.totalorder %s354, %s355
      %p369 = scmp.eq.s32.totalorder %s33, 1
      %p370 = por %p368, %p369
      %p372 = scmp.ne.s32.totalorder %s355, %s371
      %p373 = scmp.eq.s32.totalorder %s33, 0
      %p374 = por %p372, %p373
      %p375 = scmp.le.s32.totalorder 1, %s27
      %p376 = scmp.lt.s32.totalorder %s27, 3
      %p377 = pnand %p375, %p376
      %p378 = pneg %p377
      // Predicated region
      $region9: #{_forward.1} parent=5 // pred_check
        _
      $region10: #{_forward.1} parent=5 // pred_check_branch
        %380 = sbr.rel (%p377) target = $region12
      $region11: #{_forward.1} parent=5 // pred_region
        %s381 = ssub.s32 %s27, 1
        // Predicated region
        $region13: #{_forward.1} parent=11 // pred_check
          %p382 = pneg %p100
        $region14: #{_forward.1} parent=11 // pred_check_branch
          %384 = sbr.rel (%p382) target = $region16
        $region15: #{_forward.1} parent=11 // pred_region
          _
        $region16: #{_forward.1} parent=11 // pred_fallthru
          _
        // Predicated region
        $region17: #{_forward.1} parent=11 // pred_check
          %p385 = pneg %p121
        $region18: #{_forward.1} parent=11 // pred_check_branch
          %387 = sbr.rel (%p385) target = $region20
        $region19: #{_forward.1} parent=11 // pred_region
          _
        $region20: #{_forward.1} parent=11 // pred_fallthru
          _
        // Predicated region
        $region21: #{_forward.1} parent=11 // pred_check
          %p388 = pneg %p142
        $region22: #{_forward.1} parent=11 // pred_check_branch
          %390 = sbr.rel (%p388) target = $region24
        $region23: #{_forward.1} parent=11 // pred_region
          _
        $region24: #{_forward.1} parent=11 // pred_fallthru
          _
        // Predicated region
        $region25: #{_forward.1} parent=11 // pred_check
          %p391 = pneg %p163
        $region26: #{_forward.1} parent=11 // pred_check_branch
          %393 = sbr.rel (%p391) target = $region28
        $region27: #{_forward.1} parent=11 // pred_region
          _
        $region28: #{_forward.1} parent=11 // pred_fallthru
          _
        // Predicated region
        $region29: #{_forward.1} parent=11 // pred_check
          %p394 = pneg %p184
        $region30: #{_forward.1} parent=11 // pred_check_branch
          %396 = sbr.rel (%p394) target = $region32
        $region31: #{_forward.1} parent=11 // pred_region
          _
        $region32: #{_forward.1} parent=11 // pred_fallthru
          _
        // Predicated region
        $region33: #{_forward.1} parent=11 // pred_check
          %p397 = pneg %p205
        $region34: #{_forward.1} parent=11 // pred_check_branch
          %399 = sbr.rel (%p397) target = $region36
        $region35: #{_forward.1} parent=11 // pred_region
          _
        $region36: #{_forward.1} parent=11 // pred_fallthru
          _
        // Predicated region
        $region37: #{_forward.1} parent=11 // pred_check
          %p400 = pneg %p226
        $region38: #{_forward.1} parent=11 // pred_check_branch
          %402 = sbr.rel (%p400) target = $region40
        $region39: #{_forward.1} parent=11 // pred_region
          _
        $region40: #{_forward.1} parent=11 // pred_fallthru
          _
        // Predicated region
        $region41: #{_forward.1} parent=11 // pred_check
          %p403 = pneg %p247
        $region42: #{_forward.1} parent=11 // pred_check_branch
          %405 = sbr.rel (%p403) target = $region44
        $region43: #{_forward.1} parent=11 // pred_region
          _
        $region44: #{_forward.1} parent=11 // pred_fallthru
          _
        // Predicated region
        $region45: #{_forward.1} parent=11 // pred_check
          %p406 = pneg %p268
        $region46: #{_forward.1} parent=11 // pred_check_branch
          %408 = sbr.rel (%p406) target = $region48
        $region47: #{_forward.1} parent=11 // pred_region
          _
        $region48: #{_forward.1} parent=11 // pred_fallthru
          _
        // Predicated region
        $region49: #{_forward.1} parent=11 // pred_check
          %p409 = pneg %p289
        $region50: #{_forward.1} parent=11 // pred_check_branch
          %411 = sbr.rel (%p409) target = $region52
        $region51: #{_forward.1} parent=11 // pred_region
          _
        $region52: #{_forward.1} parent=11 // pred_fallthru
          _
      $region12: #{_forward.1} parent=5 // pred_fallthru
        _
      %p412 = scmp.lt.s32.totalorder %s27, 2
      // Predicated region
      $region53: #{_forward.1} parent=5 // pred_check
        %p413 = pneg %p412
      $region54: #{_forward.1} parent=5 // pred_check_branch
        %415 = sbr.rel (%p413) target = $region56
      $region55: #{_forward.1} parent=5 // pred_region
        // Predicated region
        $region57: #{_forward.1} parent=55 // pred_check
          %p416 = pneg %p47
        $region58: #{_forward.1} parent=55 // pred_check_branch
          %418 = sbr.rel (%p416) target = $region60
        $region59: #{_forward.1} parent=55 // pred_region
          %p419 = scmp.lt.s32.totalorder %s27, 1
          %s420 = scalar_select %p419, %s27, 1
          %s421 = smul.addr %s420, 2
          %s422 = smul.addr %s421, 8
          %s423 = scalar_lea.vmem %s0, %s422
        $region60: #{_forward.1} parent=55 // pred_fallthru
          _
        // Predicated region
        $region61: #{_forward.1} parent=55 // pred_check
          %p424 = pneg %p73
        $region62: #{_forward.1} parent=55 // pred_check_branch
          %426 = sbr.rel (%p424) target = $region64
        $region63: #{_forward.1} parent=55 // pred_region
          %p427 = scmp.lt.s32.totalorder %s27, 1
          %s428 = scalar_select %p427, %s27, 1
          %s429 = smul.addr %s428, 2
          %s430 = smul.addr %s429, 8
          %s431 = scalar_lea.vmem %s1, %s430
        $region64: #{_forward.1} parent=55 // pred_fallthru
          _
      $region56: #{_forward.1} parent=5 // pred_fallthru
        _
      %p432 = scmp.le.s32.totalorder 1, %s27
      %p433 = scmp.lt.s32.totalorder %s27, 3
      %p434 = pnand %p432, %p433
      %p435 = pneg %p434
      // Predicated region
      $region65: #{_forward.1} parent=5 // pred_check
        _
      $region66: #{_forward.1} parent=5 // pred_check_branch
        %437 = sbr.rel (%p434) target = $region68
      $region67: #{_forward.1} parent=5 // pred_region
        %s438 = ssub.s32 %s27, 1
        %p439 = scmp.lt.s32.totalorder %s32, 1
        %s440 = scalar_select %p439, %s32, 1
        %s441 = smul.addr %s440, 2
        %s442 = smul.addr %s441, 8
        %s443 = scalar_lea.vmem %s0, %s442
        %p444 = pneg %p53
        %p445 = pneg %p50
        %p446 = scmp.lt.s32.totalorder %s32, 1
        %s447 = scalar_select %p446, %s32, 1
        %s448 = smul.addr %s447, 2
        %s449 = smul.addr %s448, 8
        %s450 = scalar_lea.vmem %s1, %s449
        %p451 = pneg %p79
        %p452 = pneg %p76
        %p453 = pneg %p100
        %p454 = pneg %p97
        %p455 = pneg %p121
        %p456 = pneg %p118
        %p457 = pneg %p142
        %p458 = pneg %p139
        %p459 = pneg %p163
        %p460 = pneg %p160
        %p461 = pneg %p184
        %p462 = pneg %p181
        %p463 = pneg %p205
        %p464 = pneg %p202
        %p465 = pneg %p226
        %p466 = pneg %p223
        %p467 = pneg %p247
        %p468 = pneg %p244
        %p469 = pneg %p268
        %p470 = pneg %p265
        %p471 = pneg %p289
        %p472 = pneg %p286
        %p473 = pneg %p315
        %p474 = pneg %p312
        %s475 = sand.u32 %s302, 1
        %s476 = scalar_lea.sflag [#allocation3], %s475
        %s477 = sand.u32 %s302, 1
        %s478 = smul.addr %s477, 16
        %s479 = scalar_lea.vmem [#allocation2], %s478
        %p480 = pneg %p341
        %p481 = pneg %p338
        %p482 = scmp.lt.s32.totalorder %s32, 1
        %s483 = scalar_select %p482, %s32, 1
        %s484 = smul.addr %s483, 2
        %s485 = smul.addr %s484, 8
        %s486 = scalar_lea.vmem %s13, %s485
        %p487 = pneg %p367
        %p488 = pneg %p364
        %s489 = sand.u32 %s354, 1
        %s490 = scalar_lea.sflag [#allocation5], %s489
        %s491 = sand.u32 %s354, 1
        %s492 = smul.addr %s491, 16
        %s493 = scalar_lea.vmem [#allocation4], %s492
        %p494 = scmp.lt.s32.totalorder %s32, 1
        %s495 = scalar_select %p494, %s32, 1
        %s496 = smul.addr %s495, 2
        %s497 = smul.addr %s496, 8
        %s498 = scalar_lea.vmem %s0, %s497
        %p499 = scmp.lt.s32.totalorder %s32, 1
        %s500 = scalar_select %p499, %s32, 1
        %s501 = smul.addr %s500, 2
        %s502 = smul.addr %s501, 8
        %s503 = scalar_lea.vmem %s1, %s502
        %p504 = scmp.lt.s32.totalorder %s32, 1
        %s505 = scalar_select %p504, %s32, 1
        %s506 = smul.addr %s505, 2
        %s507 = smul.addr %s506, 8
        %s508 = scalar_lea.vmem %s13, %s507
        %v509 = vld [vmem:[%s498] sm:$0xff]
        %v510 = vld [vmem:[%s498 + $0x8] sm:$0xff]
        %v511 = vld [vmem:[%s503] sm:$0xff]
        %v512 = vld [vmem:[%s503 + $0x8] sm:$0xff]
        %v513 = vld [vmem:[%s2] sm:$0xf]
        %vm514 = vcmask 31744
        %v516 = vsel %vm514, %v511, 0
        %v519 = vsel %vm514, %v512, 0
        %vm521 = vcmask 1043456
        %v523 = vsel %vm521, %v513, 0
        %525 = vmatprep.subr.mxu0 0.0
        %526 = vmatpush1.msra.mxu0 %v523
        %527 = vmatprep.subr.mxu0 0.0
        %528 = vmatpush1.msra.mxu0 0.0
        %529 = vmatprep.subr.mxu0 0.0
        %530 = vmatpush1.msra.mxu0 0.0
        %531 = vmatprep.subr.mxu0 0.0
        %532 = vmatpush1.msra.mxu0 0.0
        %533 = vmatprep.subr.mxu0 0.0
        %534 = vmatpush1.msra.mxu0 0.0
        %535 = vmatprep.subr.mxu0 0.0
        %536 = vmatpush1.msra.mxu0 0.0
        %537 = vmatprep.subr.mxu0 0.0
        %538 = vmatpush1.msra.mxu0 0.0
        %539 = vmatprep.subr.mxu0 0.0
        %540 = vmatpush1.msra.mxu0 0.0
        %541 = vmatprep.subr.mxu0 0.0
        %542 = vmatpush1.msra.mxu0 0.0
        %543 = vmatprep.subr.mxu0 0.0
        %544 = vmatpush1.msra.mxu0 0.0
        %545 = vmatprep.subr.mxu0 0.0
        %546 = vmatpush1.msra.mxu0 0.0
        %547 = vmatprep.subr.mxu0 0.0
        %548 = vmatpush1.msra.mxu0 0.0
        %549 = vmatprep.subr.mxu0 0.0
        %550 = vmatpush1.msra.mxu0 0.0
        %551 = vmatprep.subr.mxu0 0.0
        %552 = vmatpush1.msra.mxu0 0.0
        %553 = vmatprep.subr.mxu0 0.0
        %554 = vmatpush1.msra.mxu0 0.0
        %555 = vmatprep.subr.mxu0 0.0
        %556 = vmatpush1.msra.mxu0 0.0
        %557 = vmatprep.subr.mxu0 0.0
        %558 = vmatpush1.msra.mxu0 0.0
        %559 = vmatprep.subr.mxu0 0.0
        %560 = vmatpush1.msra.mxu0 0.0
        %561 = vmatprep.subr.mxu0 0.0
        %562 = vmatpush1.msra.mxu0 0.0
        %563 = vmatprep.subr.mxu0 0.0
        %564 = vmatpush1.msra.mxu0 0.0
        %565 = vmatprep.subr.mxu0 0.0
        %566 = vmatpush1.msra.mxu0 0.0
        %567 = vmatprep.subr.mxu0 0.0
        %568 = vmatpush1.msra.mxu0 0.0
        %569 = vmatprep.subr.mxu0 0.0
        %570 = vmatpush1.msra.mxu0 0.0
        %571 = vmatprep.subr.mxu0 0.0
        %572 = vmatpush1.msra.mxu0 0.0
        %573 = vmatprep.subr.mxu0 0.0
        %574 = vmatpush1.msra.mxu0 0.0
        %575 = vmatprep.subr.mxu0 0.0
        %576 = vmatpush1.msra.mxu0 0.0
        %577 = vmatprep.subr.mxu0 0.0
        %578 = vmatpush1.msra.mxu0 0.0
        %579 = vmatprep.subr.mxu0 0.0
        %580 = vmatpush1.msra.mxu0 0.0
        %581 = vmatprep.subr.mxu0 0.0
        %582 = vmatpush1.msra.mxu0 0.0
        %583 = vmatprep.subr.mxu0 0.0
        %584 = vmatpush1.msra.mxu0 0.0
        %585 = vmatprep.subr.mxu0 0.0
        %586 = vmatpush1.msra.mxu0 0.0
        %587 = vmatprep.subr.mxu0 0.0
        %588 = vmatpush1.msra.mxu0 0.0
        %589 = vmatprep.mubr.f32.mxu0 0.0
        %590 = vmatmul.mubr.f32.gmra.mrb[0].mxu0 %v516
        %v591 = vpop.f32.mrb[0].mxu0
        %v592 = vadd.f32 0.0, %v591
        %v593 = vpop.f32.mrb[0].mxu0
        %594 = vmatprep.mubr.f32.mxu0 0.0
        %595 = vmatmul.mubr.f32.gmra.mrb[0].mxu0 %v519
        %v596 = vpop.f32.mrb[0].mxu0
        %v597 = vadd.f32 0.0, %v596
        %v598 = vpop.f32.mrb[0].mxu0
        %599 = vdwg.mxu0
        %v600 = vld [vmem:[%s3] sm:$0x1]
        %v602 = vlaneseq
        %v603 = vshrl.u32 %v602, 7
        %v604 = vsub.s32 0, %v603
        %v605 = vrot.slane %v600, %v604
        %vm607 = vcmask 130048
        %v609 = vsel %vm607, %v509, 0
        %v612 = vsel %vm607, %v510, 0
        %614 = vmatprep.subr.mxu0 0.0
        %615 = vmatpush1.msra.mxu0 %v592
        %616 = vmatprep.subr.mxu0 0.0
        %617 = vmatpush1.msra.mxu0 %v597
        %618 = vmatprep.subr.mxu0 0.0
        %619 = vmatpush1.msra.mxu0 0.0
        %620 = vmatprep.subr.mxu0 0.0
        %621 = vmatpush1.msra.mxu0 0.0
        %622 = vmatprep.subr.mxu0 0.0
        %623 = vmatpush1.msra.mxu0 0.0
        %624 = vmatprep.subr.mxu0 0.0
        %625 = vmatpush1.msra.mxu0 0.0
        %626 = vmatprep.subr.mxu0 0.0
        %627 = vmatpush1.msra.mxu0 0.0
        %628 = vmatprep.subr.mxu0 0.0
        %629 = vmatpush1.msra.mxu0 0.0
        %630 = vmatprep.subr.mxu0 0.0
        %631 = vmatpush1.msra.mxu0 0.0
        %632 = vmatprep.subr.mxu0 0.0
        %633 = vmatpush1.msra.mxu0 0.0
        %634 = vmatprep.subr.mxu0 0.0
        %635 = vmatpush1.msra.mxu0 0.0
        %636 = vmatprep.subr.mxu0 0.0
        %637 = vmatpush1.msra.mxu0 0.0
        %638 = vmatprep.subr.mxu0 0.0
        %639 = vmatpush1.msra.mxu0 0.0
        %640 = vmatprep.subr.mxu0 0.0
        %641 = vmatpush1.msra.mxu0 0.0
        %642 = vmatprep.subr.mxu0 0.0
        %643 = vmatpush1.msra.mxu0 0.0
        %644 = vmatprep.subr.mxu0 0.0
        %645 = vmatpush1.msra.mxu0 0.0
        %646 = vmatprep.subr.mxu0 0.0
        %647 = vmatpush1.msra.mxu0 0.0
        %648 = vmatprep.subr.mxu0 0.0
        %649 = vmatpush1.msra.mxu0 0.0
        %650 = vmatprep.subr.mxu0 0.0
        %651 = vmatpush1.msra.mxu0 0.0
        %652 = vmatprep.subr.mxu0 0.0
        %653 = vmatpush1.msra.mxu0 0.0
        %654 = vmatprep.subr.mxu0 0.0
        %655 = vmatpush1.msra.mxu0 0.0
        %656 = vmatprep.subr.mxu0 0.0
        %657 = vmatpush1.msra.mxu0 0.0
        %658 = vmatprep.subr.mxu0 0.0
        %659 = vmatpush1.msra.mxu0 0.0
        %660 = vmatprep.subr.mxu0 0.0
        %661 = vmatpush1.msra.mxu0 0.0
        %662 = vmatprep.subr.mxu0 0.0
        %663 = vmatpush1.msra.mxu0 0.0
        %664 = vmatprep.subr.mxu0 0.0
        %665 = vmatpush1.msra.mxu0 0.0
        %666 = vmatprep.subr.mxu0 0.0
        %667 = vmatpush1.msra.mxu0 0.0
        %668 = vmatprep.subr.mxu0 0.0
        %669 = vmatpush1.msra.mxu0 0.0
        %670 = vmatprep.subr.mxu0 0.0
        %671 = vmatpush1.msra.mxu0 0.0
        %672 = vmatprep.subr.mxu0 0.0
        %673 = vmatpush1.msra.mxu0 0.0
        %674 = vmatprep.subr.mxu0 0.0
        %675 = vmatpush1.msra.mxu0 0.0
        %676 = vmatprep.subr.mxu0 0.0
        %677 = vmatpush1.msra.mxu0 0.0
        %678 = vmatprep.mubr.f32.mxu0 0.0
        %679 = vmatmul.mubr.f32.gmra.mrb[0].mxu0 %v609
        %v680 = vpop.f32.mrb[0].mxu0
        %v681 = vadd.f32 %v605, %v680
        %v682 = vpop.f32.mrb[0].mxu0
        %683 = vmatprep.mubr.f32.mxu0 0.0
        %684 = vmatmul.mubr.f32.gmra.mrb[0].mxu0 %v612
        %v685 = vpop.f32.mrb[0].mxu0
        %v686 = vadd.f32 %v605, %v685
        %v687 = vpop.f32.mrb[0].mxu0
        %688 = vdwg.mxu0
        %vm689 = vcmp.ge.f32.partialorder %v681, 0.0
        %vm690 = vcmp.ge.f32.partialorder %v686, 0.0
        %v691 = vmul.f32 %v681, 0.01
        %v692 = vmul.f32 %v686, 0.01
        %v693 = vsel %vm689, %v681, %v691
        %v694 = vsel %vm690, %v686, %v692
        %v695 = vld [vmem:[%s4] sm:$0xff]
        %vm696 = vcmask 64512
        %v698 = vsel %vm696, %v693, 0
        %v701 = vsel %vm696, %v694, 0
        %703 = vmatprep.subr.mxu0 0.0
        %704 = vmatpush1.msra.mxu0 %v695
        %705 = vmatprep.subr.mxu0 0.0
        %706 = vmatpush1.msra.mxu0 0.0
        %707 = vmatprep.subr.mxu0 0.0
        %708 = vmatpush1.msra.mxu0 0.0
        %709 = vmatprep.subr.mxu0 0.0
        %710 = vmatpush1.msra.mxu0 0.0
        %711 = vmatprep.subr.mxu0 0.0
        %712 = vmatpush1.msra.mxu0 0.0
        %713 = vmatprep.subr.mxu0 0.0
        %714 = vmatpush1.msra.mxu0 0.0
        %715 = vmatprep.subr.mxu0 0.0
        %716 = vmatpush1.msra.mxu0 0.0
        %717 = vmatprep.subr.mxu0 0.0
        %718 = vmatpush1.msra.mxu0 0.0
        %719 = vmatprep.subr.mxu0 0.0
        %720 = vmatpush1.msra.mxu0 0.0
        %721 = vmatprep.subr.mxu0 0.0
        %722 = vmatpush1.msra.mxu0 0.0
        %723 = vmatprep.subr.mxu0 0.0
        %724 = vmatpush1.msra.mxu0 0.0
        %725 = vmatprep.subr.mxu0 0.0
        %726 = vmatpush1.msra.mxu0 0.0
        %727 = vmatprep.subr.mxu0 0.0
        %728 = vmatpush1.msra.mxu0 0.0
        %729 = vmatprep.subr.mxu0 0.0
        %730 = vmatpush1.msra.mxu0 0.0
        %731 = vmatprep.subr.mxu0 0.0
        %732 = vmatpush1.msra.mxu0 0.0
        %733 = vmatprep.subr.mxu0 0.0
        %734 = vmatpush1.msra.mxu0 0.0
        %735 = vmatprep.subr.mxu0 0.0
        %736 = vmatpush1.msra.mxu0 0.0
        %737 = vmatprep.subr.mxu0 0.0
        %738 = vmatpush1.msra.mxu0 0.0
        %739 = vmatprep.subr.mxu0 0.0
        %740 = vmatpush1.msra.mxu0 0.0
        %741 = vmatprep.subr.mxu0 0.0
        %742 = vmatpush1.msra.mxu0 0.0
        %743 = vmatprep.subr.mxu0 0.0
        %744 = vmatpush1.msra.mxu0 0.0
        %745 = vmatprep.subr.mxu0 0.0
        %746 = vmatpush1.msra.mxu0 0.0
        %747 = vmatprep.subr.mxu0 0.0
        %748 = vmatpush1.msra.mxu0 0.0
        %749 = vmatprep.subr.mxu0 0.0
        %750 = vmatpush1.msra.mxu0 0.0
        %751 = vmatprep.subr.mxu0 0.0
        %752 = vmatpush1.msra.mxu0 0.0
        %753 = vmatprep.subr.mxu0 0.0
        %754 = vmatpush1.msra.mxu0 0.0
        %755 = vmatprep.subr.mxu0 0.0
        %756 = vmatpush1.msra.mxu0 0.0
        %757 = vmatprep.subr.mxu0 0.0
        %758 = vmatpush1.msra.mxu0 0.0
        %759 = vmatprep.subr.mxu0 0.0
        %760 = vmatpush1.msra.mxu0 0.0
        %761 = vmatprep.subr.mxu0 0.0
        %762 = vmatpush1.msra.mxu0 0.0
        %763 = vmatprep.subr.mxu0 0.0
        %764 = vmatpush1.msra.mxu0 0.0
        %765 = vmatprep.subr.mxu0 0.0
        %766 = vmatpush1.msra.mxu0 0.0
        %767 = vmatprep.mubr.f32.mxu0 0.0
        %768 = vmatmul.mubr.f32.gmra.mrb[0].mxu0 %v698
        %v769 = vpop.f32.mrb[0].mxu0
        %v770 = vadd.f32 0.0, %v769
        %v771 = vpop.f32.mrb[0].mxu0
        %772 = vmatprep.mubr.f32.mxu0 0.0
        %773 = vmatmul.mubr.f32.gmra.mrb[0].mxu0 %v701
        %v774 = vpop.f32.mrb[0].mxu0
        %v775 = vadd.f32 0.0, %v774
        %v776 = vpop.f32.mrb[0].mxu0
        %777 = vdwg.mxu0
        %v778 = vld [vmem:[%s5] sm:$0x1]
        %v780 = vlaneseq
        %v781 = vshrl.u32 %v780, 7
        %v782 = vsub.s32 0, %v781
        %v783 = vrot.slane %v778, %v782
        %785 = vmatprep.subr.mxu0 0.0
        %786 = vmatpush1.msra.mxu0 %v770
        %787 = vmatprep.subr.mxu0 0.0
        %788 = vmatpush1.msra.mxu0 %v775
        %789 = vmatprep.subr.mxu0 0.0
        %790 = vmatpush1.msra.mxu0 0.0
        %791 = vmatprep.subr.mxu0 0.0
        %792 = vmatpush1.msra.mxu0 0.0
        %793 = vmatprep.subr.mxu0 0.0
        %794 = vmatpush1.msra.mxu0 0.0
        %795 = vmatprep.subr.mxu0 0.0
        %796 = vmatpush1.msra.mxu0 0.0
        %797 = vmatprep.subr.mxu0 0.0
        %798 = vmatpush1.msra.mxu0 0.0
        %799 = vmatprep.subr.mxu0 0.0
        %800 = vmatpush1.msra.mxu0 0.0
        %801 = vmatprep.subr.mxu0 0.0
        %802 = vmatpush1.msra.mxu0 0.0
        %803 = vmatprep.subr.mxu0 0.0
        %804 = vmatpush1.msra.mxu0 0.0
        %805 = vmatprep.subr.mxu0 0.0
        %806 = vmatpush1.msra.mxu0 0.0
        %807 = vmatprep.subr.mxu0 0.0
        %808 = vmatpush1.msra.mxu0 0.0
        %809 = vmatprep.subr.mxu0 0.0
        %810 = vmatpush1.msra.mxu0 0.0
        %811 = vmatprep.subr.mxu0 0.0
        %812 = vmatpush1.msra.mxu0 0.0
        %813 = vmatprep.subr.mxu0 0.0
        %814 = vmatpush1.msra.mxu0 0.0
        %815 = vmatprep.subr.mxu0 0.0
        %816 = vmatpush1.msra.mxu0 0.0
        %817 = vmatprep.subr.mxu0 0.0
        %818 = vmatpush1.msra.mxu0 0.0
        %819 = vmatprep.subr.mxu0 0.0
        %820 = vmatpush1.msra.mxu0 0.0
        %821 = vmatprep.subr.mxu0 0.0
        %822 = vmatpush1.msra.mxu0 0.0
        %823 = vmatprep.subr.mxu0 0.0
        %824 = vmatpush1.msra.mxu0 0.0
        %825 = vmatprep.subr.mxu0 0.0
        %826 = vmatpush1.msra.mxu0 0.0
        %827 = vmatprep.subr.mxu0 0.0
        %828 = vmatpush1.msra.mxu0 0.0
        %829 = vmatprep.subr.mxu0 0.0
        %830 = vmatpush1.msra.mxu0 0.0
        %831 = vmatprep.subr.mxu0 0.0
        %832 = vmatpush1.msra.mxu0 0.0
        %833 = vmatprep.subr.mxu0 0.0
        %834 = vmatpush1.msra.mxu0 0.0
        %835 = vmatprep.subr.mxu0 0.0
        %836 = vmatpush1.msra.mxu0 0.0
        %837 = vmatprep.subr.mxu0 0.0
        %838 = vmatpush1.msra.mxu0 0.0
        %839 = vmatprep.subr.mxu0 0.0
        %840 = vmatpush1.msra.mxu0 0.0
        %841 = vmatprep.subr.mxu0 0.0
        %842 = vmatpush1.msra.mxu0 0.0
        %843 = vmatprep.subr.mxu0 0.0
        %844 = vmatpush1.msra.mxu0 0.0
        %845 = vmatprep.subr.mxu0 0.0
        %846 = vmatpush1.msra.mxu0 0.0
        %847 = vmatprep.subr.mxu0 0.0
        %848 = vmatpush1.msra.mxu0 0.0
        %849 = vmatprep.mubr.f32.mxu0 0.0
        %850 = vmatmul.mubr.f32.gmra.mrb[0].mxu0 %v609
        %v851 = vpop.f32.mrb[0].mxu0
        %v852 = vadd.f32 %v783, %v851
        %v853 = vpop.f32.mrb[0].mxu0
        %854 = vmatprep.mubr.f32.mxu0 0.0
        %855 = vmatmul.mubr.f32.gmra.mrb[0].mxu0 %v612
        %v856 = vpop.f32.mrb[0].mxu0
        %v857 = vadd.f32 %v783, %v856
        %v858 = vpop.f32.mrb[0].mxu0
        %859 = vdwg.mxu0
        %vm860 = vcmp.ge.f32.partialorder %v852, 0.0
        %vm861 = vcmp.ge.f32.partialorder %v857, 0.0
        %v862 = vmul.f32 %v852, 0.01
        %v863 = vmul.f32 %v857, 0.01
        %v864 = vsel %vm860, %v852, %v862
        %v865 = vsel %vm861, %v857, %v863
        %v866 = vld [vmem:[%s6] sm:$0xff]
        %v867 = vld [vmem:[%s6 + $0x8] sm:$0xff]
        %v869 = vsel %vm607, %v864, 0
        %v872 = vsel %vm607, %v865, 0
        %874 = vmatprep.subr.mxu0 0.0
        %875 = vmatpush1.msra.mxu0 %v866
        %876 = vmatprep.subr.mxu0 0.0
        %877 = vmatpush1.msra.mxu0 %v867
        %878 = vmatprep.subr.mxu0 0.0
        %879 = vmatpush1.msra.mxu0 0.0
        %880 = vmatprep.subr.mxu0 0.0
        %881 = vmatpush1.msra.mxu0 0.0
        %882 = vmatprep.subr.mxu0 0.0
        %883 = vmatpush1.msra.mxu0 0.0
        %884 = vmatprep.subr.mxu0 0.0
        %885 = vmatpush1.msra.mxu0 0.0
        %886 = vmatprep.subr.mxu0 0.0
        %887 = vmatpush1.msra.mxu0 0.0
        %888 = vmatprep.subr.mxu0 0.0
        %889 = vmatpush1.msra.mxu0 0.0
        %890 = vmatprep.subr.mxu0 0.0
        %891 = vmatpush1.msra.mxu0 0.0
        %892 = vmatprep.subr.mxu0 0.0
        %893 = vmatpush1.msra.mxu0 0.0
        %894 = vmatprep.subr.mxu0 0.0
        %895 = vmatpush1.msra.mxu0 0.0
        %896 = vmatprep.subr.mxu0 0.0
        %897 = vmatpush1.msra.mxu0 0.0
        %898 = vmatprep.subr.mxu0 0.0
        %899 = vmatpush1.msra.mxu0 0.0
        %900 = vmatprep.subr.mxu0 0.0
        %901 = vmatpush1.msra.mxu0 0.0
        %902 = vmatprep.subr.mxu0 0.0
        %903 = vmatpush1.msra.mxu0 0.0
        %904 = vmatprep.subr.mxu0 0.0
        %905 = vmatpush1.msra.mxu0 0.0
        %906 = vmatprep.subr.mxu0 0.0
        %907 = vmatpush1.msra.mxu0 0.0
        %908 = vmatprep.subr.mxu0 0.0
        %909 = vmatpush1.msra.mxu0 0.0
        %910 = vmatprep.subr.mxu0 0.0
        %911 = vmatpush1.msra.mxu0 0.0
        %912 = vmatprep.subr.mxu0 0.0
        %913 = vmatpush1.msra.mxu0 0.0
        %914 = vmatprep.subr.mxu0 0.0
        %915 = vmatpush1.msra.mxu0 0.0
        %916 = vmatprep.subr.mxu0 0.0
        %917 = vmatpush1.msra.mxu0 0.0
        %918 = vmatprep.subr.mxu0 0.0
        %919 = vmatpush1.msra.mxu0 0.0
        %920 = vmatprep.subr.mxu0 0.0
        %921 = vmatpush1.msra.mxu0 0.0
        %922 = vmatprep.subr.mxu0 0.0
        %923 = vmatpush1.msra.mxu0 0.0
        %924 = vmatprep.subr.mxu0 0.0
        %925 = vmatpush1.msra.mxu0 0.0
        %926 = vmatprep.subr.mxu0 0.0
        %927 = vmatpush1.msra.mxu0 0.0
        %928 = vmatprep.subr.mxu0 0.0
        %929 = vmatpush1.msra.mxu0 0.0
        %930 = vmatprep.subr.mxu0 0.0
        %931 = vmatpush1.msra.mxu0 0.0
        %932 = vmatprep.subr.mxu0 0.0
        %933 = vmatpush1.msra.mxu0 0.0
        %934 = vmatprep.subr.mxu0 0.0
        %935 = vmatpush1.msra.mxu0 0.0
        %936 = vmatprep.subr.mxu0 0.0
        %937 = vmatpush1.msra.mxu0 0.0
        %938 = vmatprep.mubr.f32.mxu0 0.0
        %939 = vmatmul.mubr.f32.gmra.mrb[0].mxu0 %v869
        %v940 = vpop.f32.mrb[0].mxu0
        %v941 = vadd.f32 0.0, %v940
        %v942 = vpop.f32.mrb[0].mxu0
        %943 = vmatprep.mubr.f32.mxu0 0.0
        %944 = vmatmul.mubr.f32.gmra.mrb[0].mxu0 %v872
        %v945 = vpop.f32.mrb[0].mxu0
        %v946 = vadd.f32 0.0, %v945
        %v947 = vpop.f32.mrb[0].mxu0
        %948 = vdwg.mxu0
        %v949 = vld [vmem:[%s7] sm:$0x1]
        %v951 = vlaneseq
        %v952 = vshrl.u32 %v951, 7
        %v953 = vsub.s32 0, %v952
        %v954 = vrot.slane %v949, %v953
        %956 = vmatprep.subr.mxu0 0.0
        %957 = vmatpush1.msra.mxu0 %v941
        %958 = vmatprep.subr.mxu0 0.0
        %959 = vmatpush1.msra.mxu0 %v946
        %960 = vmatprep.subr.mxu0 0.0
        %961 = vmatpush1.msra.mxu0 0.0
        %962 = vmatprep.subr.mxu0 0.0
        %963 = vmatpush1.msra.mxu0 0.0
        %964 = vmatprep.subr.mxu0 0.0
        %965 = vmatpush1.msra.mxu0 0.0
        %966 = vmatprep.subr.mxu0 0.0
        %967 = vmatpush1.msra.mxu0 0.0
        %968 = vmatprep.subr.mxu0 0.0
        %969 = vmatpush1.msra.mxu0 0.0
        %970 = vmatprep.subr.mxu0 0.0
        %971 = vmatpush1.msra.mxu0 0.0
        %972 = vmatprep.subr.mxu0 0.0
        %973 = vmatpush1.msra.mxu0 0.0
        %974 = vmatprep.subr.mxu0 0.0
        %975 = vmatpush1.msra.mxu0 0.0
        %976 = vmatprep.subr.mxu0 0.0
        %977 = vmatpush1.msra.mxu0 0.0
        %978 = vmatprep.subr.mxu0 0.0
        %979 = vmatpush1.msra.mxu0 0.0
        %980 = vmatprep.subr.mxu0 0.0
        %981 = vmatpush1.msra.mxu0 0.0
        %982 = vmatprep.subr.mxu0 0.0
        %983 = vmatpush1.msra.mxu0 0.0
        %984 = vmatprep.subr.mxu0 0.0
        %985 = vmatpush1.msra.mxu0 0.0
        %986 = vmatprep.subr.mxu0 0.0
        %987 = vmatpush1.msra.mxu0 0.0
        %988 = vmatprep.subr.mxu0 0.0
        %989 = vmatpush1.msra.mxu0 0.0
        %990 = vmatprep.subr.mxu0 0.0
        %991 = vmatpush1.msra.mxu0 0.0
        %992 = vmatprep.subr.mxu0 0.0
        %993 = vmatpush1.msra.mxu0 0.0
        %994 = vmatprep.subr.mxu0 0.0
        %995 = vmatpush1.msra.mxu0 0.0
        %996 = vmatprep.subr.mxu0 0.0
        %997 = vmatpush1.msra.mxu0 0.0
        %998 = vmatprep.subr.mxu0 0.0
        %999 = vmatpush1.msra.mxu0 0.0
        %1000 = vmatprep.subr.mxu0 0.0
        %1001 = vmatpush1.msra.mxu0 0.0
        %1002 = vmatprep.subr.mxu0 0.0
        %1003 = vmatpush1.msra.mxu0 0.0
        %1004 = vmatprep.subr.mxu0 0.0
        %1005 = vmatpush1.msra.mxu0 0.0
        %1006 = vmatprep.subr.mxu0 0.0
        %1007 = vmatpush1.msra.mxu0 0.0
        %1008 = vmatprep.subr.mxu0 0.0
        %1009 = vmatpush1.msra.mxu0 0.0
        %1010 = vmatprep.subr.mxu0 0.0
        %1011 = vmatpush1.msra.mxu0 0.0
        %1012 = vmatprep.subr.mxu0 0.0
        %1013 = vmatpush1.msra.mxu0 0.0
        %1014 = vmatprep.subr.mxu0 0.0
        %1015 = vmatpush1.msra.mxu0 0.0
        %1016 = vmatprep.subr.mxu0 0.0
        %1017 = vmatpush1.msra.mxu0 0.0
        %1018 = vmatprep.subr.mxu0 0.0
        %1019 = vmatpush1.msra.mxu0 0.0
        %1020 = vmatprep.mubr.f32.mxu0 0.0
        %1021 = vmatmul.mubr.f32.gmra.mrb[0].mxu0 %v609
        %v1022 = vpop.f32.mrb[0].mxu0
        %v1023 = vadd.f32 %v954, %v1022
        %v1024 = vpop.f32.mrb[0].mxu0
        %1025 = vmatprep.mubr.f32.mxu0 0.0
        %1026 = vmatmul.mubr.f32.gmra.mrb[0].mxu0 %v612
        %v1027 = vpop.f32.mrb[0].mxu0
        %v1028 = vadd.f32 %v954, %v1027
        %v1029 = vpop.f32.mrb[0].mxu0
        %1030 = vdwg.mxu0
        %vm1031 = vcmp.ge.f32.partialorder %v1023, 0.0
        %vm1032 = vcmp.ge.f32.partialorder %v1028, 0.0
        %v1033 = vmul.f32 %v1023, 0.01
        %v1034 = vmul.f32 %v1028, 0.01
        %v1035 = vsel %vm1031, %v1023, %v1033
        %v1036 = vsel %vm1032, %v1028, %v1034
        %v1038 = vsel %vm696, %v1035, 0
        %v1041 = vsel %vm696, %v1036, 0
        %1043 = vmatprep.subr.mxu0 0.0
        %1044 = vmatpush1.xpose.msra.mxu0 %v1038
        %1045 = vmatprep.subr.mxu0 0.0
        %1046 = vmatpush1.xpose.msra.mxu0 %v1041
        %1047 = vmatprep.subr.mxu0 0.0
        %1048 = vmatpush1.xpose.msra.mxu0 0.0
        %1049 = vmatprep.subr.mxu0 0.0
        %1050 = vmatpush1.xpose.msra.mxu0 0.0
        %1051 = vmatprep.subr.mxu0 0.0
        %1052 = vmatpush1.xpose.msra.mxu0 0.0
        %1053 = vmatprep.subr.mxu0 0.0
        %1054 = vmatpush1.xpose.msra.mxu0 0.0
        %1055 = vmatprep.subr.mxu0 0.0
        %1056 = vmatpush1.xpose.msra.mxu0 0.0
        %1057 = vmatprep.subr.mxu0 0.0
        %1058 = vmatpush1.xpose.msra.mxu0 0.0
        %1059 = vmatprep.subr.mxu0 0.0
        %1060 = vmatpush1.xpose.msra.mxu0 0.0
        %1061 = vmatprep.subr.mxu0 0.0
        %1062 = vmatpush1.xpose.msra.mxu0 0.0
        %1063 = vmatprep.subr.mxu0 0.0
        %1064 = vmatpush1.xpose.msra.mxu0 0.0
        %1065 = vmatprep.subr.mxu0 0.0
        %1066 = vmatpush1.xpose.msra.mxu0 0.0
        %1067 = vmatprep.subr.mxu0 0.0
        %1068 = vmatpush1.xpose.msra.mxu0 0.0
        %1069 = vmatprep.subr.mxu0 0.0
        %1070 = vmatpush1.xpose.msra.mxu0 0.0
        %1071 = vmatprep.subr.mxu0 0.0
        %1072 = vmatpush1.xpose.msra.mxu0 0.0
        %1073 = vmatprep.subr.mxu0 0.0
        %1074 = vmatpush1.xpose.msra.mxu0 0.0
        %1075 = vmatprep.subr.mxu0 0.0
        %1076 = vmatpush1.xpose.msra.mxu0 0.0
        %1077 = vmatprep.subr.mxu0 0.0
        %1078 = vmatpush1.xpose.msra.mxu0 0.0
        %1079 = vmatprep.subr.mxu0 0.0
        %1080 = vmatpush1.xpose.msra.mxu0 0.0
        %1081 = vmatprep.subr.mxu0 0.0
        %1082 = vmatpush1.xpose.msra.mxu0 0.0
        %1083 = vmatprep.subr.mxu0 0.0
        %1084 = vmatpush1.xpose.msra.mxu0 0.0
        %1085 = vmatprep.subr.mxu0 0.0
        %1086 = vmatpush1.xpose.msra.mxu0 0.0
        %1087 = vmatprep.subr.mxu0 0.0
        %1088 = vmatpush1.xpose.msra.mxu0 0.0
        %1089 = vmatprep.subr.mxu0 0.0
        %1090 = vmatpush1.xpose.msra.mxu0 0.0
        %1091 = vmatprep.subr.mxu0 0.0
        %1092 = vmatpush1.xpose.msra.mxu0 0.0
        %1093 = vmatprep.subr.mxu0 0.0
        %1094 = vmatpush1.xpose.msra.mxu0 0.0
        %1095 = vmatprep.subr.mxu0 0.0
        %1096 = vmatpush1.xpose.msra.mxu0 0.0
        %1097 = vmatprep.subr.mxu0 0.0
        %1098 = vmatpush1.xpose.msra.mxu0 0.0
        %1099 = vmatprep.subr.mxu0 0.0
        %1100 = vmatpush1.xpose.msra.mxu0 0.0
        %1101 = vmatprep.subr.mxu0 0.0
        %1102 = vmatpush1.xpose.msra.mxu0 0.0
        %1103 = vmatprep.subr.mxu0 0.0
        %1104 = vmatpush1.xpose.msra.mxu0 0.0
        %1105 = vmatprep.subr.mxu0 0.0
        %1106 = vmatpush1.xpose.msra.mxu0 0.0
        %1107 = vmatprep.mubr.f32.mxu0 0.0
        %1108 = vmatmul.mubr.f32.gmra.mrb[0].mxu0 %v1038
        %v1109 = vpop.f32.mrb[0].mxu0
        %v1110 = vadd.f32 0.0, %v1109
        %v1111 = vpop.f32.mrb[0].mxu0
        %1112 = vmatprep.mubr.f32.mxu0 0.0
        %1113 = vmatmul.mubr.f32.gmra.mrb[0].mxu0 %v1041
        %v1114 = vpop.f32.mrb[0].mxu0
        %v1115 = vadd.f32 0.0, %v1114
        %v1116 = vpop.f32.mrb[0].mxu0
        %1117 = vdwg.mxu0
        %v1118 = vxor.u32 %v1110, 2147483648
        %v1119 = vxor.u32 %v1115, 2147483648
        %v1120 = vmul.f32 %v1118, 1.442695
        %v1121 = vpow.pop %v1120
        %v1122 = vmul.f32 %v1119, 1.442695
        %v1123 = vpow.pop %v1122
        %v1124 = vadd.f32 %v1121, 1.0
        %v1125 = vadd.f32 %v1123, 1.0
        %v1126 = vrcp.pop %v1124
        %v1127 = vmul.f32 1.0, %v1126
        %v1128 = vrcp.pop %v1125
        %v1129 = vmul.f32 1.0, %v1128
        %1130 = vst.msk [vmem:[%s479] sm:$0xff] %vm607, %v1127
        %1131 = vst.msk [vmem:[%s479 + $0x8] sm:$0xff] %vm607, %v1129
        %v1132 = vld [vmem:[%s8] sm:$0xff]
        %v1133 = vld [vmem:[%s8 + $0x8] sm:$0xff]
        %1134 = vmatprep.subr.mxu0 0.0
        %1135 = vmatpush1.msra.mxu0 %v1132
        %1136 = vmatprep.subr.mxu0 0.0
        %1137 = vmatpush1.msra.mxu0 %v1133
        %1138 = vmatprep.subr.mxu0 0.0
        %1139 = vmatpush1.msra.mxu0 0.0
        %1140 = vmatprep.subr.mxu0 0.0
        %1141 = vmatpush1.msra.mxu0 0.0
        %1142 = vmatprep.subr.mxu0 0.0
        %1143 = vmatpush1.msra.mxu0 0.0
        %1144 = vmatprep.subr.mxu0 0.0
        %1145 = vmatpush1.msra.mxu0 0.0
        %1146 = vmatprep.subr.mxu0 0.0
        %1147 = vmatpush1.msra.mxu0 0.0
        %1148 = vmatprep.subr.mxu0 0.0
        %1149 = vmatpush1.msra.mxu0 0.0
        %1150 = vmatprep.subr.mxu0 0.0
        %1151 = vmatpush1.msra.mxu0 0.0
        %1152 = vmatprep.subr.mxu0 0.0
        %1153 = vmatpush1.msra.mxu0 0.0
        %1154 = vmatprep.subr.mxu0 0.0
        %1155 = vmatpush1.msra.mxu0 0.0
        %1156 = vmatprep.subr.mxu0 0.0
        %1157 = vmatpush1.msra.mxu0 0.0
        %1158 = vmatprep.subr.mxu0 0.0
        %1159 = vmatpush1.msra.mxu0 0.0
        %1160 = vmatprep.subr.mxu0 0.0
        %1161 = vmatpush1.msra.mxu0 0.0
        %1162 = vmatprep.subr.mxu0 0.0
        %1163 = vmatpush1.msra.mxu0 0.0
        %1164 = vmatprep.subr.mxu0 0.0
        %1165 = vmatpush1.msra.mxu0 0.0
        %1166 = vmatprep.subr.mxu0 0.0
        %1167 = vmatpush1.msra.mxu0 0.0
        %1168 = vmatprep.subr.mxu0 0.0
        %1169 = vmatpush1.msra.mxu0 0.0
        %1170 = vmatprep.subr.mxu0 0.0
        %1171 = vmatpush1.msra.mxu0 0.0
        %1172 = vmatprep.subr.mxu0 0.0
        %1173 = vmatpush1.msra.mxu0 0.0
        %1174 = vmatprep.subr.mxu0 0.0
        %1175 = vmatpush1.msra.mxu0 0.0
        %1176 = vmatprep.subr.mxu0 0.0
        %1177 = vmatpush1.msra.mxu0 0.0
        %1178 = vmatprep.subr.mxu0 0.0
        %1179 = vmatpush1.msra.mxu0 0.0
        %1180 = vmatprep.subr.mxu0 0.0
        %1181 = vmatpush1.msra.mxu0 0.0
        %1182 = vmatprep.subr.mxu0 0.0
        %1183 = vmatpush1.msra.mxu0 0.0
        %1184 = vmatprep.subr.mxu0 0.0
        %1185 = vmatpush1.msra.mxu0 0.0
        %1186 = vmatprep.subr.mxu0 0.0
        %1187 = vmatpush1.msra.mxu0 0.0
        %1188 = vmatprep.subr.mxu0 0.0
        %1189 = vmatpush1.msra.mxu0 0.0
        %1190 = vmatprep.subr.mxu0 0.0
        %1191 = vmatpush1.msra.mxu0 0.0
        %1192 = vmatprep.subr.mxu0 0.0
        %1193 = vmatpush1.msra.mxu0 0.0
        %1194 = vmatprep.subr.mxu0 0.0
        %1195 = vmatpush1.msra.mxu0 0.0
        %1196 = vmatprep.subr.mxu0 0.0
        %1197 = vmatpush1.msra.mxu0 0.0
        %1198 = vmatprep.mubr.f32.mxu0 0.0
        %1199 = vmatmul.mubr.f32.gmra.mrb[0].mxu0 %v869
        %v1200 = vpop.f32.mrb[0].mxu0
        %v1201 = vadd.f32 0.0, %v1200
        %v1202 = vpop.f32.mrb[0].mxu0
        %1203 = vmatprep.mubr.f32.mxu0 0.0
        %1204 = vmatmul.mubr.f32.gmra.mrb[0].mxu0 %v872
        %v1205 = vpop.f32.mrb[0].mxu0
        %v1206 = vadd.f32 0.0, %v1205
        %v1207 = vpop.f32.mrb[0].mxu0
        %1208 = vdwg.mxu0
        %v1209 = vld [vmem:[%s9] sm:$0x1]
        %v1211 = vlaneseq
        %v1212 = vshrl.u32 %v1211, 7
        %v1213 = vsub.s32 0, %v1212
        %v1214 = vrot.slane %v1209, %v1213
        %1216 = vmatprep.subr.mxu0 0.0
        %1217 = vmatpush1.msra.mxu0 %v1201
        %1218 = vmatprep.subr.mxu0 0.0
        %1219 = vmatpush1.msra.mxu0 %v1206
        %1220 = vmatprep.subr.mxu0 0.0
        %1221 = vmatpush1.msra.mxu0 0.0
        %1222 = vmatprep.subr.mxu0 0.0
        %1223 = vmatpush1.msra.mxu0 0.0
        %1224 = vmatprep.subr.mxu0 0.0
        %1225 = vmatpush1.msra.mxu0 0.0
        %1226 = vmatprep.subr.mxu0 0.0
        %1227 = vmatpush1.msra.mxu0 0.0
        %1228 = vmatprep.subr.mxu0 0.0
        %1229 = vmatpush1.msra.mxu0 0.0
        %1230 = vmatprep.subr.mxu0 0.0
        %1231 = vmatpush1.msra.mxu0 0.0
        %1232 = vmatprep.subr.mxu0 0.0
        %1233 = vmatpush1.msra.mxu0 0.0
        %1234 = vmatprep.subr.mxu0 0.0
        %1235 = vmatpush1.msra.mxu0 0.0
        %1236 = vmatprep.subr.mxu0 0.0
        %1237 = vmatpush1.msra.mxu0 0.0
        %1238 = vmatprep.subr.mxu0 0.0
        %1239 = vmatpush1.msra.mxu0 0.0
        %1240 = vmatprep.subr.mxu0 0.0
        %1241 = vmatpush1.msra.mxu0 0.0
        %1242 = vmatprep.subr.mxu0 0.0
        %1243 = vmatpush1.msra.mxu0 0.0
        %1244 = vmatprep.subr.mxu0 0.0
        %1245 = vmatpush1.msra.mxu0 0.0
        %1246 = vmatprep.subr.mxu0 0.0
        %1247 = vmatpush1.msra.mxu0 0.0
        %1248 = vmatprep.subr.mxu0 0.0
        %1249 = vmatpush1.msra.mxu0 0.0
        %1250 = vmatprep.subr.mxu0 0.0
        %1251 = vmatpush1.msra.mxu0 0.0
        %1252 = vmatprep.subr.mxu0 0.0
        %1253 = vmatpush1.msra.mxu0 0.0
        %1254 = vmatprep.subr.mxu0 0.0
        %1255 = vmatpush1.msra.mxu0 0.0
        %1256 = vmatprep.subr.mxu0 0.0
        %1257 = vmatpush1.msra.mxu0 0.0
        %1258 = vmatprep.subr.mxu0 0.0
        %1259 = vmatpush1.msra.mxu0 0.0
        %1260 = vmatprep.subr.mxu0 0.0
        %1261 = vmatpush1.msra.mxu0 0.0
        %1262 = vmatprep.subr.mxu0 0.0
        %1263 = vmatpush1.msra.mxu0 0.0
        %1264 = vmatprep.subr.mxu0 0.0
        %1265 = vmatpush1.msra.mxu0 0.0
        %1266 = vmatprep.subr.mxu0 0.0
        %1267 = vmatpush1.msra.mxu0 0.0
        %1268 = vmatprep.subr.mxu0 0.0
        %1269 = vmatpush1.msra.mxu0 0.0
        %1270 = vmatprep.subr.mxu0 0.0
        %1271 = vmatpush1.msra.mxu0 0.0
        %1272 = vmatprep.subr.mxu0 0.0
        %1273 = vmatpush1.msra.mxu0 0.0
        %1274 = vmatprep.subr.mxu0 0.0
        %1275 = vmatpush1.msra.mxu0 0.0
        %1276 = vmatprep.subr.mxu0 0.0
        %1277 = vmatpush1.msra.mxu0 0.0
        %1278 = vmatprep.subr.mxu0 0.0
        %1279 = vmatpush1.msra.mxu0 0.0
        %1280 = vmatprep.mubr.f32.mxu0 0.0
        %1281 = vmatmul.mubr.f32.gmra.mrb[0].mxu0 %v609
        %v1282 = vpop.f32.mrb[0].mxu0
        %v1283 = vadd.f32 %v1214, %v1282
        %v1284 = vpop.f32.mrb[0].mxu0
        %1285 = vmatprep.mubr.f32.mxu0 0.0
        %1286 = vmatmul.mubr.f32.gmra.mrb[0].mxu0 %v612
        %v1287 = vpop.f32.mrb[0].mxu0
        %v1288 = vadd.f32 %v1214, %v1287
        %v1289 = vpop.f32.mrb[0].mxu0
        %1290 = vdwg.mxu0
        %vm1291 = vcmp.ge.f32.partialorder %v1283, 0.0
        %vm1292 = vcmp.ge.f32.partialorder %v1288, 0.0
        %v1293 = vmul.f32 %v1283, 0.01
        %v1294 = vmul.f32 %v1288, 0.01
        %v1295 = vsel %vm1291, %v1283, %v1293
        %v1296 = vsel %vm1292, %v1288, %v1294
        %v1297 = vld [vmem:[%s10] sm:$0xff]
        %v1299 = vsel %vm696, %v1295, 0
        %v1302 = vsel %vm696, %v1296, 0
        %1304 = vmatprep.subr.mxu0 0.0
        %1305 = vmatpush1.msra.mxu0 %v1297
        %1306 = vmatprep.subr.mxu0 0.0
        %1307 = vmatpush1.msra.mxu0 0.0
        %1308 = vmatprep.subr.mxu0 0.0
        %1309 = vmatpush1.msra.mxu0 0.0
        %1310 = vmatprep.subr.mxu0 0.0
        %1311 = vmatpush1.msra.mxu0 0.0
        %1312 = vmatprep.subr.mxu0 0.0
        %1313 = vmatpush1.msra.mxu0 0.0
        %1314 = vmatprep.subr.mxu0 0.0
        %1315 = vmatpush1.msra.mxu0 0.0
        %1316 = vmatprep.subr.mxu0 0.0
        %1317 = vmatpush1.msra.mxu0 0.0
        %1318 = vmatprep.subr.mxu0 0.0
        %1319 = vmatpush1.msra.mxu0 0.0
        %1320 = vmatprep.subr.mxu0 0.0
        %1321 = vmatpush1.msra.mxu0 0.0
        %1322 = vmatprep.subr.mxu0 0.0
        %1323 = vmatpush1.msra.mxu0 0.0
        %1324 = vmatprep.subr.mxu0 0.0
        %1325 = vmatpush1.msra.mxu0 0.0
        %1326 = vmatprep.subr.mxu0 0.0
        %1327 = vmatpush1.msra.mxu0 0.0
        %1328 = vmatprep.subr.mxu0 0.0
        %1329 = vmatpush1.msra.mxu0 0.0
        %1330 = vmatprep.subr.mxu0 0.0
        %1331 = vmatpush1.msra.mxu0 0.0
        %1332 = vmatprep.subr.mxu0 0.0
        %1333 = vmatpush1.msra.mxu0 0.0
        %1334 = vmatprep.subr.mxu0 0.0
        %1335 = vmatpush1.msra.mxu0 0.0
        %1336 = vmatprep.subr.mxu0 0.0
        %1337 = vmatpush1.msra.mxu0 0.0
        %1338 = vmatprep.subr.mxu0 0.0
        %1339 = vmatpush1.msra.mxu0 0.0
        %1340 = vmatprep.subr.mxu0 0.0
        %1341 = vmatpush1.msra.mxu0 0.0
        %1342 = vmatprep.subr.mxu0 0.0
        %1343 = vmatpush1.msra.mxu0 0.0
        %1344 = vmatprep.subr.mxu0 0.0
        %1345 = vmatpush1.msra.mxu0 0.0
        %1346 = vmatprep.subr.mxu0 0.0
        %1347 = vmatpush1.msra.mxu0 0.0
        %1348 = vmatprep.subr.mxu0 0.0
        %1349 = vmatpush1.msra.mxu0 0.0
        %1350 = vmatprep.subr.mxu0 0.0
        %1351 = vmatpush1.msra.mxu0 0.0
        %1352 = vmatprep.subr.mxu0 0.0
        %1353 = vmatpush1.msra.mxu0 0.0
        %1354 = vmatprep.subr.mxu0 0.0
        %1355 = vmatpush1.msra.mxu0 0.0
        %1356 = vmatprep.subr.mxu0 0.0
        %1357 = vmatpush1.msra.mxu0 0.0
        %1358 = vmatprep.subr.mxu0 0.0
        %1359 = vmatpush1.msra.mxu0 0.0
        %1360 = vmatprep.subr.mxu0 0.0
        %1361 = vmatpush1.msra.mxu0 0.0
        %1362 = vmatprep.subr.mxu0 0.0
        %1363 = vmatpush1.msra.mxu0 0.0
        %1364 = vmatprep.subr.mxu0 0.0
        %1365 = vmatpush1.msra.mxu0 0.0
        %1366 = vmatprep.subr.mxu0 0.0
        %1367 = vmatpush1.msra.mxu0 0.0
        %1368 = vmatprep.mubr.f32.mxu0 0.0
        %1369 = vmatmul.mubr.f32.gmra.mrb[0].mxu0 %v1299
        %v1370 = vpop.f32.mrb[0].mxu0
        %v1371 = vadd.f32 0.0, %v1370
        %v1372 = vpop.f32.mrb[0].mxu0
        %1373 = vmatprep.mubr.f32.mxu0 0.0
        %1374 = vmatmul.mubr.f32.gmra.mrb[0].mxu0 %v1302
        %v1375 = vpop.f32.mrb[0].mxu0
        %v1376 = vadd.f32 0.0, %v1375
        %v1377 = vpop.f32.mrb[0].mxu0
        %1378 = vdwg.mxu0
        %v1379 = vld [vmem:[%s11] sm:$0x1]
        %v1381 = vlaneseq
        %v1382 = vshrl.u32 %v1381, 7
        %v1383 = vsub.s32 0, %v1382
        %v1384 = vrot.slane %v1379, %v1383
        %1386 = vmatprep.subr.mxu0 0.0
        %1387 = vmatpush1.msra.mxu0 %v1371
        %1388 = vmatprep.subr.mxu0 0.0
        %1389 = vmatpush1.msra.mxu0 %v1376
        %1390 = vmatprep.subr.mxu0 0.0
        %1391 = vmatpush1.msra.mxu0 0.0
        %1392 = vmatprep.subr.mxu0 0.0
        %1393 = vmatpush1.msra.mxu0 0.0
        %1394 = vmatprep.subr.mxu0 0.0
        %1395 = vmatpush1.msra.mxu0 0.0
        %1396 = vmatprep.subr.mxu0 0.0
        %1397 = vmatpush1.msra.mxu0 0.0
        %1398 = vmatprep.subr.mxu0 0.0
        %1399 = vmatpush1.msra.mxu0 0.0
        %1400 = vmatprep.subr.mxu0 0.0
        %1401 = vmatpush1.msra.mxu0 0.0
        %1402 = vmatprep.subr.mxu0 0.0
        %1403 = vmatpush1.msra.mxu0 0.0
        %1404 = vmatprep.subr.mxu0 0.0
        %1405 = vmatpush1.msra.mxu0 0.0
        %1406 = vmatprep.subr.mxu0 0.0
        %1407 = vmatpush1.msra.mxu0 0.0
        %1408 = vmatprep.subr.mxu0 0.0
        %1409 = vmatpush1.msra.mxu0 0.0
        %1410 = vmatprep.subr.mxu0 0.0
        %1411 = vmatpush1.msra.mxu0 0.0
        %1412 = vmatprep.subr.mxu0 0.0
        %1413 = vmatpush1.msra.mxu0 0.0
        %1414 = vmatprep.subr.mxu0 0.0
        %1415 = vmatpush1.msra.mxu0 0.0
        %1416 = vmatprep.subr.mxu0 0.0
        %1417 = vmatpush1.msra.mxu0 0.0
        %1418 = vmatprep.subr.mxu0 0.0
        %1419 = vmatpush1.msra.mxu0 0.0
        %1420 = vmatprep.subr.mxu0 0.0
        %1421 = vmatpush1.msra.mxu0 0.0
        %1422 = vmatprep.subr.mxu0 0.0
        %1423 = vmatpush1.msra.mxu0 0.0
        %1424 = vmatprep.subr.mxu0 0.0
        %1425 = vmatpush1.msra.mxu0 0.0
        %1426 = vmatprep.subr.mxu0 0.0
        %1427 = vmatpush1.msra.mxu0 0.0
        %1428 = vmatprep.subr.mxu0 0.0
        %1429 = vmatpush1.msra.mxu0 0.0
        %1430 = vmatprep.subr.mxu0 0.0
        %1431 = vmatpush1.msra.mxu0 0.0
        %1432 = vmatprep.subr.mxu0 0.0
        %1433 = vmatpush1.msra.mxu0 0.0
        %1434 = vmatprep.subr.mxu0 0.0
        %1435 = vmatpush1.msra.mxu0 0.0
        %1436 = vmatprep.subr.mxu0 0.0
        %1437 = vmatpush1.msra.mxu0 0.0
        %1438 = vmatprep.subr.mxu0 0.0
        %1439 = vmatpush1.msra.mxu0 0.0
        %1440 = vmatprep.subr.mxu0 0.0
        %1441 = vmatpush1.msra.mxu0 0.0
        %1442 = vmatprep.subr.mxu0 0.0
        %1443 = vmatpush1.msra.mxu0 0.0
        %1444 = vmatprep.subr.mxu0 0.0
        %1445 = vmatpush1.msra.mxu0 0.0
        %1446 = vmatprep.subr.mxu0 0.0
        %1447 = vmatpush1.msra.mxu0 0.0
        %1448 = vmatprep.subr.mxu0 0.0
        %1449 = vmatpush1.msra.mxu0 0.0
        %1450 = vmatprep.mubr.f32.mxu0 0.0
        %1451 = vmatmul.mubr.f32.gmra.mrb[0].mxu0 %v609
        %v1452 = vpop.f32.mrb[0].mxu0
        %v1453 = vadd.f32 %v1384, %v1452
        %v1454 = vpop.f32.mrb[0].mxu0
        %1455 = vmatprep.mubr.f32.mxu0 0.0
        %1456 = vmatmul.mubr.f32.gmra.mrb[0].mxu0 %v612
        %v1457 = vpop.f32.mrb[0].mxu0
        %v1458 = vadd.f32 %v1384, %v1457
        %v1459 = vpop.f32.mrb[0].mxu0
        %1460 = vdwg.mxu0
        %vm1461 = vcmp.ge.f32.partialorder %v1453, 0.0
        %vm1462 = vcmp.ge.f32.partialorder %v1458, 0.0
        %v1463 = vmul.f32 %v1453, 0.01
        %v1464 = vmul.f32 %v1458, 0.01
        %v1465 = vsel %vm1461, %v1453, %v1463
        %v1466 = vsel %vm1462, %v1458, %v1464
        %1467 = vst.msk [vmem:[%s508] sm:$0xff] %vm514, %v1465
        %1468 = vst.msk [vmem:[%s508 + $0x8] sm:$0xff] %vm514, %v1466
        %1469 = vst.msk [vmem:[%s493] sm:$0xff] %vm607, %v864
        %1470 = vst.msk [vmem:[%s493 + $0x8] sm:$0xff] %vm607, %v865
        %s1471 = sand.u32 %s302, 1
        %s1472 = scalar_lea.sflag [#allocation3], %s1471
        %s1473 = sand.u32 %s302, 1
        %s1474 = smul.addr %s1473, 16
        %s1475 = scalar_lea.vmem [#allocation2], %s1474
        %p1476 = scmp.lt.s32.totalorder %s32, 1
        %s1477 = scalar_select %p1476, %s32, 1
        %s1478 = smul.addr %s1477, 2
        %s1479 = smul.addr %s1478, 8
        %s1480 = scalar_lea.vmem %s13, %s1479
        %s1481 = sand.u32 %s354, 1
        %s1482 = scalar_lea.sflag [#allocation5], %s1481
        %s1483 = sand.u32 %s354, 1
        %s1484 = smul.addr %s1483, 16
        %s1485 = scalar_lea.vmem [#allocation4], %s1484
        // Predicated region
        $region69: #{_forward.1} parent=67 // pred_check
          %p1486 = pneg %p312
        $region70: #{_forward.1} parent=67 // pred_check_branch
          %1488 = sbr.rel (%p1486) target = $region72
        $region71: #{_forward.1} parent=67 // pred_region
          %s1490 = ssub.s32 256, 256
          %1491 = vsyncadd %s1472, %s1490
          %s1492 = smul.addr %s32, 2
          %s1493 = smul.addr %s1492, 128
          %s1494 = scalar_lea.hbm %s12, %s1493
          %s1495 = sshll.u32 %s1475, 4
          %s1496 = int_to_ptr.vmem [resolvable:$true] %s1495
          %1501 = dma.vmem_to_hbm [thread:$0]  %s1496, 256, %s1494, %s1472, 128, 128, 8
        $region72: #{_forward.1} parent=67 // pred_fallthru
          _
        // Predicated region
        $region73: #{_forward.1} parent=67 // pred_check
          %p1502 = pneg %p338
        $region74: #{_forward.1} parent=67 // pred_check_branch
          %1504 = sbr.rel (%p1502) target = $region76
        $region75: #{_forward.1} parent=67 // pred_region
          _
        $region76: #{_forward.1} parent=67 // pred_fallthru
          _
        // Predicated region
        $region77: #{_forward.1} parent=67 // pred_check
          %p1505 = pneg %p364
        $region78: #{_forward.1} parent=67 // pred_check_branch
          %1507 = sbr.rel (%p1505) target = $region80
        $region79: #{_forward.1} parent=67 // pred_region
          %s1509 = ssub.s32 256, 256
          %1510 = vsyncadd %s1482, %s1509
          %s1511 = smul.addr %s32, 2
          %s1512 = smul.addr %s1511, 128
          %s1513 = scalar_lea.hbm %s14, %s1512
          %s1514 = sshll.u32 %s1485, 4
          %s1515 = int_to_ptr.vmem [resolvable:$true] %s1514
          %1520 = dma.vmem_to_hbm [thread:$0]  %s1515, 256, %s1513, %s1482, 128, 128, 8
        $region80: #{_forward.1} parent=67 // pred_fallthru
          _
      $region68: #{_forward.1} parent=5 // pred_fallthru
        _
      %p1521 = scmp.le.s32.totalorder 2, %s27
      // Predicated region
      $region81: #{_forward.1} parent=5 // pred_check
        %p1522 = pneg %p1521
      $region82: #{_forward.1} parent=5 // pred_check_branch
        %1524 = sbr.rel (%p1522) target = $region84
      $region83: #{_forward.1} parent=5 // pred_region
        %s1525 = ssub.s32 %s27, 2
        // Predicated region
        $region85: #{_forward.1} parent=83 // pred_check
          %p1526 = pneg %p318
        $region86: #{_forward.1} parent=83 // pred_check_branch
          %1528 = sbr.rel (%p1526) target = $region88
        $region87: #{_forward.1} parent=83 // pred_region
          %s1529 = sand.u32 %s303, 1
          %s1530 = scalar_lea.sflag [#allocation3], %s1529
          %s1531 = sand.u32 %s303, 1
          %s1532 = smul.addr %s1531, 16
          %s1533 = scalar_lea.vmem [#allocation2], %s1532
          %1534 = dma.done %s1530, 256
        $region88: #{_forward.1} parent=83 // pred_fallthru
          _
        // Predicated region
        $region89: #{_forward.1} parent=83 // pred_check
          %p1535 = pneg %p344
        $region90: #{_forward.1} parent=83 // pred_check_branch
          %1537 = sbr.rel (%p1535) target = $region92
        $region91: #{_forward.1} parent=83 // pred_region
          %p1538 = scmp.lt.s32.totalorder %s33, 1
          %s1539 = scalar_select %p1538, %s33, 1
          %s1540 = smul.addr %s1539, 2
          %s1541 = smul.addr %s1540, 8
          %s1542 = scalar_lea.vmem %s13, %s1541
        $region92: #{_forward.1} parent=83 // pred_fallthru
          _
        // Predicated region
        $region93: #{_forward.1} parent=83 // pred_check
          %p1543 = pneg %p370
        $region94: #{_forward.1} parent=83 // pred_check_branch
          %1545 = sbr.rel (%p1543) target = $region96
        $region95: #{_forward.1} parent=83 // pred_region
          %s1546 = sand.u32 %s355, 1
          %s1547 = scalar_lea.sflag [#allocation5], %s1546
          %s1548 = sand.u32 %s355, 1
          %s1549 = smul.addr %s1548, 16
          %s1550 = scalar_lea.vmem [#allocation4], %s1549
          %1551 = dma.done %s1547, 256
        $region96: #{_forward.1} parent=83 // pred_fallthru
          _
      $region84: #{_forward.1} parent=5 // pred_fallthru
        _
    $region6: #{_forward.1} parent=1 // loop_footer
      %s31 = sadd.s32 1, %s27
    $region7: #{_forward.1} parent=1 // loop_footer_branch
      %26 = sbr.rel target = $region3
    $region8: #{_forward.1} parent=1 // loop_exit
      _
    %1552 = vsyncpa [#allocation3], 1
    %s1553 = scalar_lea.sflag [#allocation3], 1
    %1554 = vsyncpa %s1553, 1
    %1555 = vsyncpa [#allocation5], 1
    %s1556 = scalar_lea.sflag [#allocation5], 1
    %1557 = vsyncpa %s1556, 1

</llo_original>
